<compile_context>
chip_gen: v7x
topology: tpu7x:2x2x1
jax: 0.10.0
libtpu: 0.0.40
codegen_flags: <defaults>
</compile_context>

<pallas_src>
import functools
import math

import jax
import jax.numpy as jnp
from jax import lax
from jax.experimental import pallas as pl
from jax.experimental.pallas import tpu as pltpu

EPS = 1e-5


def _mgite_kernel(u_ref, f_ref, w_ref, gb_ref, mask_ref, out_ref, slab_ref,
                  *, W, inv_cnt):
    CP, L = u_ref.shape
    u = u_ref[...]                 # [CP, L]  channels-first, lane-flat, zero-padded
    f = f_ref[...]                 # [CP, L]
    maskb = mask_ref[...]          # [CP, L]  pre-broadcast valid-pixel mask (hoisted)
    gb = gb_ref[...]               # [CP, 4]  packed (g1, b1, g2, b2) columns

    # Constant lane offset of each 3x3 tap in the flattened padded grid.
    offs = [(ky - 1) * (W + 2) + (kx - 1) for ky in range(3) for kx in range(3)]

    def conv3x3(x, wm):
        # 3x3 "same" conv as im2col + ONE MXU dot (K = 9*CP).  Each tap is a static
        # lane rotation (pltpu.roll -> XLU vrot; no doubled buffer, no unaligned
        # lane slices) streamed into the shared VMEM scratch slab, so only one tap
        # is live in vregs at a time.  Wraparound lanes only ever land on
        # masked/invalid positions for valid output pixels.
        for t9, off in enumerate(offs):
            tap = x if off == 0 else pltpu.roll(x, shift=(-off) % L, axis=1)
            slab_ref[t9 * CP:(t9 + 1) * CP, :] = tap
        return jnp.dot(wm, slab_ref[...], preferred_element_type=jnp.float32)

    def bn_relu(x, g, b):
        # BatchNorm2d (training mode): masked single-pass per-channel stats over the
        # N*H*W valid pixels, biased variance, then affine + relu.  The two
        # reductions (sum, sum-of-squares) are fused into a single XLU reduce.
        xm = x * maskb
        s = jnp.sum(jnp.concatenate([xm, xm * x], axis=0),
                    axis=1, keepdims=True) * inv_cnt              # [2*CP, 1]
        mean, ex2 = s[:CP], s[CP:]
        var = jnp.maximum(ex2 - mean * mean, 0.0)
        y = (x - mean) * lax.rsqrt(var + EPS) * g + b
        return jnp.maximum(y, 0.0)

    wa = w_ref[:CP, :]             # A-operator weight matrix, [CP, 9*CP]
    ws = w_ref[CP:, :]             # S-operator weight matrix, [CP, 9*CP]

    # stage 1: t = relu(bn1(f - A(u))); the mask multiply re-imposes the zero-padding
    # ring (and tail) so conv S sees a freshly zero-padded tensor.
    t = bn_relu(f - conv3x3(u, wa), gb[:, 0:1], gb[:, 1:2]) * maskb
    # stage 2: u_new = u + relu(bn2(S(t)))   (non-interior lanes hold garbage but are
    # never read back by the wrapper and never enter the masked BN statistics).
    out_ref[...] = u + bn_relu(conv3x3(t, ws), gb[:, 2:3], gb[:, 3:4])


def mgite_flat(u_flat, f_flat, w_packed, gb, mask, *, N, H, W):
    """Flat-layout MgIte step: all operands already in kernel layout (see wrapper)."""
    CP, L = u_flat.shape
    kern = functools.partial(_mgite_kernel, W=W, inv_cnt=1.0 / (N * H * W))
    vmem = pl.BlockSpec(memory_space=pltpu.MemorySpace.VMEM)
    return pl.pallas_call(
        kern,
        out_shape=jax.ShapeDtypeStruct((CP, L), jnp.float32),
        in_specs=[vmem] * 5,
        out_specs=vmem,
        scratch_shapes=[pltpu.VMEM((9 * CP, L), jnp.float32)],   # shared im2col slab
    )(u_flat, f_flat, w_packed, gb, mask)


def mgite_forward(u, f, wA, wS, g1, b1, g2, b2):
    """u, f: [N, C, H, W]; wA, wS: [C, C, 3, 3] (OIHW, bias=False); g*, b*: [C]."""
    N, C, H, W = u.shape
    CP = pl.cdiv(C, 8) * 8                    # channels padded to a full sublane tile
    M = N * (H + 2) * (W + 2)                 # flattened zero-padded pixel count
    L = pl.cdiv(M, 128) * 128                 # lane-dense length (multiple of 128)

    def to_flat(x):                           # NCHW -> channels-first lane-flat [CP, L]
        xp = jnp.pad(x, ((0, 0), (0, CP - C), (1, 1), (1, 1)))
        xp = jnp.transpose(xp, (1, 0, 2, 3)).reshape(CP, M)
        return jnp.pad(xp, ((0, 0), (0, L - M)))

    def to_wmat(w):                           # OIHW -> [CP, 9*CP], col = tap*CP + ci
        wp = jnp.pad(w, ((0, CP - C), (0, CP - C), (0, 0), (0, 0)))
        return jnp.transpose(wp, (0, 2, 3, 1)).reshape(CP, 9 * CP)

    def to_col(v):                            # [C] -> [CP]
        return jnp.pad(v, (0, CP - C))

    # Packed small operands: one weight slab for both convs, one gamma/beta table.
    w_packed = jnp.concatenate([to_wmat(wA), to_wmat(wS)], axis=0)     # [2*CP, 9*CP]
    gb = jnp.stack([to_col(g1), to_col(b1), to_col(g2), to_col(b2)], axis=1)  # [CP, 4]

    # Interior-pixel mask in flat padded coordinates, pre-broadcast to [CP, L].
    q = jnp.arange(L, dtype=jnp.int32)
    hw = (H + 2) * (W + 2)
    yp, xq = (q % hw) // (W + 2), q % (W + 2)
    mask1 = ((q < M) & (yp >= 1) & (yp <= H) & (xq >= 1) & (xq <= W))
    mask = jnp.broadcast_to(mask1.astype(jnp.float32)[None, :], (CP, L))

    out_flat = mgite_flat(to_flat(u), to_flat(f), w_packed, gb, mask, N=N, H=H, W=W)

    # Layout plumbing back to NCHW (interior pixels, real channels only).
    u_new = jnp.transpose(
        out_flat[:C, :M].reshape(C, N, H + 2, W + 2)[:, :, 1:H + 1, 1:W + 1],
        (1, 0, 2, 3))
    return u_new, f


# ----------------------- pure-JAX reference (for checking) -----------------------
def _bn_ref(x, g, b):
    mean = x.mean(axis=(0, 2, 3), keepdims=True)
    var = ((x - mean) ** 2).mean(axis=(0, 2, 3), keepdims=True)
    return ((x - mean) * lax.rsqrt(var + EPS) * g.reshape(1, -1, 1, 1)
            + b.reshape(1, -1, 1, 1))


def mgite_ref(u, f, wA, wS, g1, b1, g2, b2):
    dn = ("NCHW", "OIHW", "NCHW")
    t = jax.nn.relu(_bn_ref(
        f - lax.conv_general_dilated(u, wA, (1, 1), "SAME", dimension_numbers=dn),
        g1, b1))
    u_new = u + jax.nn.relu(_bn_ref(
        lax.conv_general_dilated(t, wS, (1, 1), "SAME", dimension_numbers=dn),
        g2, b2))
    return u_new, f


if __name__ == "__main__":
    N, C, H, W = 2, 4, 16, 16
    key = jax.random.PRNGKey(0)
    ku, kf, ka, ks = jax.random.split(key, 4)

    # Inputs in PyTorch NCHW layout.
    u = jax.random.normal(ku, (N, C, H, W), jnp.float32)
    f_in = jax.random.normal(kf, (N, C, H, W), jnp.float32)

    # Conv weights in PyTorch OIHW layout; bias=False (MgNet-style A/S operators).
    scale = 1.0 / math.sqrt(C * 9)
    wA = jax.random.normal(ka, (C, C, 3, 3), jnp.float32) * scale
    wS = jax.random.normal(ks, (C, C, 3, 3), jnp.float32) * scale

    # BatchNorm2d default init: gamma=1, beta=0.
    g1 = jnp.ones((C,), jnp.float32)
    b1 = jnp.zeros((C,), jnp.float32)
    g2 = jnp.ones((C,), jnp.float32)
    b2 = jnp.zeros((C,), jnp.float32)

    u_out, f_out = jax.jit(mgite_forward)(u, f_in, wA, wS, g1, b1, g2, b2)
    jax.block_until_ready(u_out)

    u_ref, _ = mgite_ref(u, f_in, wA, wS, g1, b1, g2, b2)
    assert jnp.allclose(u_out, u_ref, atol=2e-4, rtol=2e-4), "mismatch vs reference"
    assert jnp.array_equal(f_out, f_in)

    print("KERNEL_OK")
</pallas_src>

<mosaic_0001>
module attributes {stable_mosaic.version = 11 : i64} {
  func.func @_mgite_kernel(%arg0: memref<8x768xf32, #tpu.memory_space<vmem>>, %arg1: memref<8x768xf32, #tpu.memory_space<vmem>>, %arg2: memref<16x72xf32, #tpu.memory_space<vmem>>, %arg3: memref<8x4xf32, #tpu.memory_space<vmem>>, %arg4: memref<8x768xf32, #tpu.memory_space<vmem>>, %arg5: memref<8x768xf32, #tpu.memory_space<vmem>>, %arg6: memref<72x768xf32, #tpu.memory_space<vmem>>) attributes {dimension_semantics = [], scalar_prefetch = 0 : i64, scratch_operands = 1 : i64, tpu.core_type = #tpu.core_type<tc>} {
    %c0 = arith.constant 0 : index
    %c0_0 = arith.constant 0 : index
    %0 = vector.load %arg0[%c0, %c0_0] : memref<8x768xf32, #tpu.memory_space<vmem>>, vector<8x768xf32>
    %c0_1 = arith.constant 0 : index
    %c0_2 = arith.constant 0 : index
    %1 = vector.load %arg1[%c0_1, %c0_2] : memref<8x768xf32, #tpu.memory_space<vmem>>, vector<8x768xf32>
    %c0_3 = arith.constant 0 : index
    %c0_4 = arith.constant 0 : index
    %2 = vector.load %arg4[%c0_3, %c0_4] : memref<8x768xf32, #tpu.memory_space<vmem>>, vector<8x768xf32>
    %c0_5 = arith.constant 0 : index
    %c0_6 = arith.constant 0 : index
    %3 = vector.load %arg3[%c0_5, %c0_6] : memref<8x4xf32, #tpu.memory_space<vmem>>, vector<8x4xf32>
    %c0_7 = arith.constant 0 : index
    %c0_8 = arith.constant 0 : index
    %4 = vector.load %arg2[%c0_7, %c0_8] : memref<16x72xf32, #tpu.memory_space<vmem>>, vector<8x72xf32>
    %c8 = arith.constant 8 : index
    %c0_9 = arith.constant 0 : index
    %5 = vector.load %arg2[%c8, %c0_9] : memref<16x72xf32, #tpu.memory_space<vmem>>, vector<8x72xf32>
    %c19_i32 = arith.constant 19 : i32
    %6 = tpu.dynamic_rotate %0 by %c19_i32 dim 1 : vector<8x768xf32>, i32 -> vector<8x768xf32>
    %c0_10 = arith.constant 0 : index
    %c0_11 = arith.constant 0 : index
    %7 = vector.load %arg6[%c0_10, %c0_11] : memref<72x768xf32, #tpu.memory_space<vmem>>, vector<8x768xf32>
    tpu.vector_store %arg6[%c0_10, %c0_11], %6 {strides = array<i32>} : memref<72x768xf32, #tpu.memory_space<vmem>>, vector<8x768xf32>,
    %c18_i32 = arith.constant 18 : i32
    %8 = tpu.dynamic_rotate %0 by %c18_i32 dim 1 : vector<8x768xf32>, i32 -> vector<8x768xf32>
    %c8_12 = arith.constant 8 : index
    %c0_13 = arith.constant 0 : index
    %9 = vector.load %arg6[%c8_12, %c0_13] : memref<72x768xf32, #tpu.memory_space<vmem>>, vector<8x768xf32>
    tpu.vector_store %arg6[%c8_12, %c0_13], %8 {strides = array<i32>} : memref<72x768xf32, #tpu.memory_space<vmem>>, vector<8x768xf32>,
    %c17_i32 = arith.constant 17 : i32
    %10 = tpu.dynamic_rotate %0 by %c17_i32 dim 1 : vector<8x768xf32>, i32 -> vector<8x768xf32>
    %c16 = arith.constant 16 : index
    %c0_14 = arith.constant 0 : index
    %11 = vector.load %arg6[%c16, %c0_14] : memref<72x768xf32, #tpu.memory_space<vmem>>, vector<8x768xf32>
    tpu.vector_store %arg6[%c16, %c0_14], %10 {strides = array<i32>} : memref<72x768xf32, #tpu.memory_space<vmem>>, vector<8x768xf32>,
    %c1_i32 = arith.constant 1 : i32
    %12 = tpu.dynamic_rotate %0 by %c1_i32 dim 1 : vector<8x768xf32>, i32 -> vector<8x768xf32>
    %c24 = arith.constant 24 : index
    %c0_15 = arith.constant 0 : index
    %13 = vector.load %arg6[%c24, %c0_15] : memref<72x768xf32, #tpu.memory_space<vmem>>, vector<8x768xf32>
    tpu.vector_store %arg6[%c24, %c0_15], %12 {strides = array<i32>} : memref<72x768xf32, #tpu.memory_space<vmem>>, vector<8x768xf32>,
    %c32 = arith.constant 32 : index
    %c0_16 = arith.constant 0 : index
    %14 = vector.load %arg6[%c32, %c0_16] : memref<72x768xf32, #tpu.memory_space<vmem>>, vector<8x768xf32>
    tpu.vector_store %arg6[%c32, %c0_16], %0 {strides = array<i32>} : memref<72x768xf32, #tpu.memory_space<vmem>>, vector<8x768xf32>,
    %c767_i32 = arith.constant 767 : i32
    %15 = tpu.dynamic_rotate %0 by %c767_i32 dim 1 : vector<8x768xf32>, i32 -> vector<8x768xf32>
    %c40 = arith.constant 40 : index
    %c0_17 = arith.constant 0 : index
    %16 = vector.load %arg6[%c40, %c0_17] : memref<72x768xf32, #tpu.memory_space<vmem>>, vector<8x768xf32>
    tpu.vector_store %arg6[%c40, %c0_17], %15 {strides = array<i32>} : memref<72x768xf32, #tpu.memory_space<vmem>>, vector<8x768xf32>,
    %c751_i32 = arith.constant 751 : i32
    %17 = tpu.dynamic_rotate %0 by %c751_i32 dim 1 : vector<8x768xf32>, i32 -> vector<8x768xf32>
    %c48 = arith.constant 48 : index
    %c0_18 = arith.constant 0 : index
    %18 = vector.load %arg6[%c48, %c0_18] : memref<72x768xf32, #tpu.memory_space<vmem>>, vector<8x768xf32>
    tpu.vector_store %arg6[%c48, %c0_18], %17 {strides = array<i32>} : memref<72x768xf32, #tpu.memory_space<vmem>>, vector<8x768xf32>,
    %c750_i32 = arith.constant 750 : i32
    %19 = tpu.dynamic_rotate %0 by %c750_i32 dim 1 : vector<8x768xf32>, i32 -> vector<8x768xf32>
    %c56 = arith.constant 56 : index
    %c0_19 = arith.constant 0 : index
    %20 = vector.load %arg6[%c56, %c0_19] : memref<72x768xf32, #tpu.memory_space<vmem>>, vector<8x768xf32>
    tpu.vector_store %arg6[%c56, %c0_19], %19 {strides = array<i32>} : memref<72x768xf32, #tpu.memory_space<vmem>>, vector<8x768xf32>,
    %c749_i32 = arith.constant 749 : i32
    %21 = tpu.dynamic_rotate %0 by %c749_i32 dim 1 : vector<8x768xf32>, i32 -> vector<8x768xf32>
    %c64 = arith.constant 64 : index
    %c0_20 = arith.constant 0 : index
    %22 = vector.load %arg6[%c64, %c0_20] : memref<72x768xf32, #tpu.memory_space<vmem>>, vector<8x768xf32>
    tpu.vector_store %arg6[%c64, %c0_20], %21 {strides = array<i32>} : memref<72x768xf32, #tpu.memory_space<vmem>>, vector<8x768xf32>,
    %c0_21 = arith.constant 0 : index
    %c0_22 = arith.constant 0 : index
    %23 = vector.load %arg6[%c0_21, %c0_22] : memref<72x768xf32, #tpu.memory_space<vmem>>, vector<72x768xf32>
    %cst = arith.constant dense<0.000000e+00> : vector<8x768xf32>
    %24 = tpu.matmul %4, %23, %cst {dimension_numbers = #tpu.dot_dimension_numbers<[1], [0], [0], [1], [0, 0, 1, 1], [], []>} : vector<8x72xf32>, vector<72x768xf32>, vector<8x768xf32> -> vector<8x768xf32>
    %25 = arith.subf %1, %24 : vector<8x768xf32>
    %26 = vector.extract_strided_slice %3 {offsets = [0, 0], sizes = [8, 1], strides = [1, 1]} : vector<8x4xf32> to vector<8x1xf32>
    %27 = vector.extract_strided_slice %3 {offsets = [0, 1], sizes = [8, 1], strides = [1, 1]} : vector<8x4xf32> to vector<8x1xf32>
    %28 = arith.mulf %25, %2 : vector<8x768xf32>
    %29 = arith.mulf %28, %25 : vector<8x768xf32>
    %30 = tpu.concatenate %28, %29 in 0 : vector<8x768xf32>, vector<8x768xf32> -> vector<16x768xf32>
    %cst_23 = arith.constant dense<0.000000e+00> : vector<16xf32>
    %31 = vector.multi_reduction <add>, %30, %cst_23 [1] : vector<16x768xf32> to vector<16xf32>
    %32 = vector.shape_cast %31 : vector<16xf32> to vector<16x1xf32>
    %cst_24 = arith.constant 0.001953125 : f32
    %33 = vector.broadcast %cst_24 : f32 to vector<16x1xf32>
    %34 = arith.mulf %32, %33 : vector<16x1xf32>
    %35 = vector.extract_strided_slice %34 {offsets = [0, 0], sizes = [8, 1], strides = [1, 1]} : vector<16x1xf32> to vector<8x1xf32>
    %36 = vector.extract_strided_slice %34 {offsets = [8, 0], sizes = [8, 1], strides = [1, 1]} : vector<16x1xf32> to vector<8x1xf32>
    %37 = arith.mulf %35, %35 : vector<8x1xf32>
    %38 = arith.subf %36, %37 : vector<8x1xf32>
    %cst_25 = arith.constant 0.000000e+00 : f32
    %39 = vector.broadcast %cst_25 : f32 to vector<8x1xf32>
    %40 = arith.maximumf %38, %39 : vector<8x1xf32>
    %41 = vector.broadcast %35 : vector<8x1xf32> to vector<8x768xf32>
    %42 = arith.subf %25, %41 : vector<8x768xf32>
    %cst_26 = arith.constant 9.99999974E-6 : f32
    %43 = vector.broadcast %cst_26 : f32 to vector<8x1xf32>
    %44 = arith.addf %40, %43 : vector<8x1xf32>
    %45 = math.rsqrt %44 : vector<8x1xf32>
    %46 = vector.broadcast %45 : vector<8x1xf32> to vector<8x768xf32>
    %47 = arith.mulf %42, %46 : vector<8x768xf32>
    %48 = vector.broadcast %26 : vector<8x1xf32> to vector<8x768xf32>
    %49 = arith.mulf %47, %48 : vector<8x768xf32>
    %50 = vector.broadcast %27 : vector<8x1xf32> to vector<8x768xf32>
    %51 = arith.addf %49, %50 : vector<8x768xf32>
    %cst_27 = arith.constant 0.000000e+00 : f32
    %52 = vector.broadcast %cst_27 : f32 to vector<8x768xf32>
    %53 = arith.maximumf %51, %52 : vector<8x768xf32>
    %54 = arith.mulf %53, %2 : vector<8x768xf32>
    %c19_i32_28 = arith.constant 19 : i32
    %55 = tpu.dynamic_rotate %54 by %c19_i32_28 dim 1 : vector<8x768xf32>, i32 -> vector<8x768xf32>
    %c0_29 = arith.constant 0 : index
    %c0_30 = arith.constant 0 : index
    %56 = vector.load %arg6[%c0_29, %c0_30] : memref<72x768xf32, #tpu.memory_space<vmem>>, vector<8x768xf32>
    tpu.vector_store %arg6[%c0_29, %c0_30], %55 {strides = array<i32>} : memref<72x768xf32, #tpu.memory_space<vmem>>, vector<8x768xf32>,
    %c18_i32_31 = arith.constant 18 : i32
    %57 = tpu.dynamic_rotate %54 by %c18_i32_31 dim 1 : vector<8x768xf32>, i32 -> vector<8x768xf32>
    %c8_32 = arith.constant 8 : index
    %c0_33 = arith.constant 0 : index
    %58 = vector.load %arg6[%c8_32, %c0_33] : memref<72x768xf32, #tpu.memory_space<vmem>>, vector<8x768xf32>
    tpu.vector_store %arg6[%c8_32, %c0_33], %57 {strides = array<i32>} : memref<72x768xf32, #tpu.memory_space<vmem>>, vector<8x768xf32>,
    %c17_i32_34 = arith.constant 17 : i32
    %59 = tpu.dynamic_rotate %54 by %c17_i32_34 dim 1 : vector<8x768xf32>, i32 -> vector<8x768xf32>
    %c16_35 = arith.constant 16 : index
    %c0_36 = arith.constant 0 : index
    %60 = vector.load %arg6[%c16_35, %c0_36] : memref<72x768xf32, #tpu.memory_space<vmem>>, vector<8x768xf32>
    tpu.vector_store %arg6[%c16_35, %c0_36], %59 {strides = array<i32>} : memref<72x768xf32, #tpu.memory_space<vmem>>, vector<8x768xf32>,
    %c1_i32_37 = arith.constant 1 : i32
    %61 = tpu.dynamic_rotate %54 by %c1_i32_37 dim 1 : vector<8x768xf32>, i32 -> vector<8x768xf32>
    %c24_38 = arith.constant 24 : index
    %c0_39 = arith.constant 0 : index
    %62 = vector.load %arg6[%c24_38, %c0_39] : memref<72x768xf32, #tpu.memory_space<vmem>>, vector<8x768xf32>
    tpu.vector_store %arg6[%c24_38, %c0_39], %61 {strides = array<i32>} : memref<72x768xf32, #tpu.memory_space<vmem>>, vector<8x768xf32>,
    %c32_40 = arith.constant 32 : index
    %c0_41 = arith.constant 0 : index
    %63 = vector.load %arg6[%c32_40, %c0_41] : memref<72x768xf32, #tpu.memory_space<vmem>>, vector<8x768xf32>
    tpu.vector_store %arg6[%c32_40, %c0_41], %54 {strides = array<i32>} : memref<72x768xf32, #tpu.memory_space<vmem>>, vector<8x768xf32>,
    %c767_i32_42 = arith.constant 767 : i32
    %64 = tpu.dynamic_rotate %54 by %c767_i32_42 dim 1 : vector<8x768xf32>, i32 -> vector<8x768xf32>
    %c40_43 = arith.constant 40 : index
    %c0_44 = arith.constant 0 : index
    %65 = vector.load %arg6[%c40_43, %c0_44] : memref<72x768xf32, #tpu.memory_space<vmem>>, vector<8x768xf32>
    tpu.vector_store %arg6[%c40_43, %c0_44], %64 {strides = array<i32>} : memref<72x768xf32, #tpu.memory_space<vmem>>, vector<8x768xf32>,
    %c751_i32_45 = arith.constant 751 : i32
    %66 = tpu.dynamic_rotate %54 by %c751_i32_45 dim 1 : vector<8x768xf32>, i32 -> vector<8x768xf32>
    %c48_46 = arith.constant 48 : index
    %c0_47 = arith.constant 0 : index
    %67 = vector.load %arg6[%c48_46, %c0_47] : memref<72x768xf32, #tpu.memory_space<vmem>>, vector<8x768xf32>
    tpu.vector_store %arg6[%c48_46, %c0_47], %66 {strides = array<i32>} : memref<72x768xf32, #tpu.memory_space<vmem>>, vector<8x768xf32>,
    %c750_i32_48 = arith.constant 750 : i32
    %68 = tpu.dynamic_rotate %54 by %c750_i32_48 dim 1 : vector<8x768xf32>, i32 -> vector<8x768xf32>
    %c56_49 = arith.constant 56 : index
    %c0_50 = arith.constant 0 : index
    %69 = vector.load %arg6[%c56_49, %c0_50] : memref<72x768xf32, #tpu.memory_space<vmem>>, vector<8x768xf32>
    tpu.vector_store %arg6[%c56_49, %c0_50], %68 {strides = array<i32>} : memref<72x768xf32, #tpu.memory_space<vmem>>, vector<8x768xf32>,
    %c749_i32_51 = arith.constant 749 : i32
    %70 = tpu.dynamic_rotate %54 by %c749_i32_51 dim 1 : vector<8x768xf32>, i32 -> vector<8x768xf32>
    %c64_52 = arith.constant 64 : index
    %c0_53 = arith.constant 0 : index
    %71 = vector.load %arg6[%c64_52, %c0_53] : memref<72x768xf32, #tpu.memory_space<vmem>>, vector<8x768xf32>
    tpu.vector_store %arg6[%c64_52, %c0_53], %70 {strides = array<i32>} : memref<72x768xf32, #tpu.memory_space<vmem>>, vector<8x768xf32>,
    %c0_54 = arith.constant 0 : index
    %c0_55 = arith.constant 0 : index
    %72 = vector.load %arg6[%c0_54, %c0_55] : memref<72x768xf32, #tpu.memory_space<vmem>>, vector<72x768xf32>
    %cst_56 = arith.constant dense<0.000000e+00> : vector<8x768xf32>
    %73 = tpu.matmul %5, %72, %cst_56 {dimension_numbers = #tpu.dot_dimension_numbers<[1], [0], [0], [1], [0, 0, 1, 1], [], []>} : vector<8x72xf32>, vector<72x768xf32>, vector<8x768xf32> -> vector<8x768xf32>
    %74 = vector.extract_strided_slice %3 {offsets = [0, 2], sizes = [8, 1], strides = [1, 1]} : vector<8x4xf32> to vector<8x1xf32>
    %75 = vector.extract_strided_slice %3 {offsets = [0, 3], sizes = [8, 1], strides = [1, 1]} : vector<8x4xf32> to vector<8x1xf32>
    %76 = arith.mulf %73, %2 : vector<8x768xf32>
    %77 = arith.mulf %76, %73 : vector<8x768xf32>
    %78 = tpu.concatenate %76, %77 in 0 : vector<8x768xf32>, vector<8x768xf32> -> vector<16x768xf32>
    %cst_57 = arith.constant dense<0.000000e+00> : vector<16xf32>
    %79 = vector.multi_reduction <add>, %78, %cst_57 [1] : vector<16x768xf32> to vector<16xf32>
    %80 = vector.shape_cast %79 : vector<16xf32> to vector<16x1xf32>
    %cst_58 = arith.constant 0.001953125 : f32
    %81 = vector.broadcast %cst_58 : f32 to vector<16x1xf32>
    %82 = arith.mulf %80, %81 : vector<16x1xf32>
    %83 = vector.extract_strided_slice %82 {offsets = [0, 0], sizes = [8, 1], strides = [1, 1]} : vector<16x1xf32> to vector<8x1xf32>
    %84 = vector.extract_strided_slice %82 {offsets = [8, 0], sizes = [8, 1], strides = [1, 1]} : vector<16x1xf32> to vector<8x1xf32>
    %85 = arith.mulf %83, %83 : vector<8x1xf32>
    %86 = arith.subf %84, %85 : vector<8x1xf32>
    %cst_59 = arith.constant 0.000000e+00 : f32
    %87 = vector.broadcast %cst_59 : f32 to vector<8x1xf32>
    %88 = arith.maximumf %86, %87 : vector<8x1xf32>
    %89 = vector.broadcast %83 : vector<8x1xf32> to vector<8x768xf32>
    %90 = arith.subf %73, %89 : vector<8x768xf32>
    %cst_60 = arith.constant 9.99999974E-6 : f32
    %91 = vector.broadcast %cst_60 : f32 to vector<8x1xf32>
    %92 = arith.addf %88, %91 : vector<8x1xf32>
    %93 = math.rsqrt %92 : vector<8x1xf32>
    %94 = vector.broadcast %93 : vector<8x1xf32> to vector<8x768xf32>
    %95 = arith.mulf %90, %94 : vector<8x768xf32>
    %96 = vector.broadcast %74 : vector<8x1xf32> to vector<8x768xf32>
    %97 = arith.mulf %95, %96 : vector<8x768xf32>
    %98 = vector.broadcast %75 : vector<8x1xf32> to vector<8x768xf32>
    %99 = arith.addf %97, %98 : vector<8x768xf32>
    %cst_61 = arith.constant 0.000000e+00 : f32
    %100 = vector.broadcast %cst_61 : f32 to vector<8x768xf32>
    %101 = arith.maximumf %99, %100 : vector<8x768xf32>
    %102 = arith.addf %0, %101 : vector<8x768xf32>
    %c0_62 = arith.constant 0 : index
    %c0_63 = arith.constant 0 : index
    %103 = vector.load %arg5[%c0_62, %c0_63] : memref<8x768xf32, #tpu.memory_space<vmem>>, vector<8x768xf32>
    tpu.vector_store %arg5[%c0_62, %c0_63], %102 {strides = array<i32>} : memref<8x768xf32, #tpu.memory_space<vmem>>, vector<8x768xf32>,
    return
  }
}

</mosaic_0001>

<llo_original>
// kernel: mgite_forward.1
$region0: #{mgite_forward.1}
  #allocation0 [shape = 'u32[]', space=smem, size = 0x4, offset = 0x4, fixed_abs, tag = 'smem constant byte address 0x4 - core index']
  #allocation1 [shape = 'u32[144,128]{1,0:T(1,128)}', space=vmem, size = 0x12000, scoped, tag = 'internal scratch']
  #allocation2 [shape = 'f32[72,768]{1,0:T(8,128)}', space=vmem, size = 0x36000, scoped, tag = 'scratch operand']
  %s0 = inlined_call_operand.vmem [shape: f32[8,768], index: 0, kind: input, shape index: {}]
  %s1 = inlined_call_operand.vmem [shape: f32[8,768], index: 1, kind: input, shape index: {}]
  %s2 = inlined_call_operand.vmem [shape: f32[16,72], index: 2, kind: input, shape index: {}]
  %s3 = inlined_call_operand.vmem [shape: f32[8,4], index: 3, kind: input, shape index: {}]
  %s4 = inlined_call_operand.vmem [shape: f32[8,768], index: 4, kind: input, shape index: {}]
  %s5 = inlined_call_operand.vmem [shape: f32[8,768], index: 5, kind: output, shape index: {}]
  %s6 = sld [smem:[#allocation0]]
  $region30: #{mgite_forward.1} parent=0
    _
  %s8 = ssub.s32 1, %s6
  %s9 = scalar_select 0, %s8, %s6
  // Predicated region
  $region2: #{mgite_forward.1} parent=0 // pred_check
    _
  $region3: #{mgite_forward.1} parent=0 // pred_check_branch
    %11 = sbr.rel (0) target = $region5
  $region4: #{mgite_forward.1} parent=0 // pred_region
    _
  $region5: #{mgite_forward.1} parent=0 // pred_fallthru
    _
  // Predicated region
  $region6: #{mgite_forward.1} parent=0 // pred_check
    _
  $region7: #{mgite_forward.1} parent=0 // pred_check_branch
    %13 = sbr.rel (0) target = $region9
  $region8: #{mgite_forward.1} parent=0 // pred_region
    _
  $region9: #{mgite_forward.1} parent=0 // pred_fallthru
    _
  // Predicated region
  $region10: #{mgite_forward.1} parent=0 // pred_check
    _
  $region11: #{mgite_forward.1} parent=0 // pred_check_branch
    %15 = sbr.rel (0) target = $region13
  $region12: #{mgite_forward.1} parent=0 // pred_region
    _
  $region13: #{mgite_forward.1} parent=0 // pred_fallthru
    _
  // Predicated region
  $region14: #{mgite_forward.1} parent=0 // pred_check
    _
  $region15: #{mgite_forward.1} parent=0 // pred_check_branch
    %17 = sbr.rel (0) target = $region17
  $region16: #{mgite_forward.1} parent=0 // pred_region
    _
  $region17: #{mgite_forward.1} parent=0 // pred_fallthru
    _
  // Predicated region
  $region18: #{mgite_forward.1} parent=0 // pred_check
    _
  $region19: #{mgite_forward.1} parent=0 // pred_check_branch
    %19 = sbr.rel (0) target = $region21
  $region20: #{mgite_forward.1} parent=0 // pred_region
    _
  $region21: #{mgite_forward.1} parent=0 // pred_fallthru
    _
  %v20 = vld [vmem:[%s0] sm:$0xff]
  %v21 = vld [vmem:[%s0 + $0x8] sm:$0xff]
  %v22 = vld [vmem:[%s0 + $0x10] sm:$0xff]
  %v23 = vld [vmem:[%s0 + $0x18] sm:$0xff]
  %v24 = vld [vmem:[%s0 + $0x20] sm:$0xff]
  %v25 = vld [vmem:[%s0 + $0x28] sm:$0xff]
  %v26 = vld [vmem:[%s1] sm:$0xff]
  %v27 = vld [vmem:[%s1 + $0x8] sm:$0xff]
  %v28 = vld [vmem:[%s1 + $0x10] sm:$0xff]
  %v29 = vld [vmem:[%s1 + $0x18] sm:$0xff]
  %v30 = vld [vmem:[%s1 + $0x20] sm:$0xff]
  %v31 = vld [vmem:[%s1 + $0x28] sm:$0xff]
  %v32 = vld [vmem:[%s4] sm:$0xff]
  %v33 = vld [vmem:[%s4 + $0x8] sm:$0xff]
  %v34 = vld [vmem:[%s4 + $0x10] sm:$0xff]
  %v35 = vld [vmem:[%s4 + $0x18] sm:$0xff]
  %v36 = vld [vmem:[%s4 + $0x20] sm:$0xff]
  %v37 = vld [vmem:[%s4 + $0x28] sm:$0xff]
  %v38 = vld [vmem:[%s3] sm:$0xff]
  %v39 = vld [vmem:[%s2] sm:$0xff]
  %v40 = vld [vmem:[%s2 + $0x8] sm:$0xff]
  %41 = vrot.lane.b32.xlu0 %v20, 19
  %v42 = vpop.permute.xlu0 %41
  %43 = vrot.lane.b32.xlu0 %v21, 19
  %v44 = vpop.permute.xlu0 %43
  %45 = vrot.lane.b32.xlu0 %v22, 19
  %v46 = vpop.permute.xlu0 %45
  %47 = vrot.lane.b32.xlu0 %v23, 19
  %v48 = vpop.permute.xlu0 %47
  %49 = vrot.lane.b32.xlu0 %v24, 19
  %v50 = vpop.permute.xlu0 %49
  %51 = vrot.lane.b32.xlu0 %v25, 19
  %v52 = vpop.permute.xlu0 %51
  %v53 = vlaneseq
  %v54 = vand.u32 %v53, 127
  %vm55 = vcmp.lt.s32.totalorder %v54, 19
  %v56 = vsel %vm55, %v50, %v52
  %v57 = vsel %vm55, %v48, %v50
  %v58 = vsel %vm55, %v46, %v48
  %v59 = vsel %vm55, %v44, %v46
  %v60 = vsel %vm55, %v42, %v44
  %v61 = vsel %vm55, %v52, %v42
  %62 = vst [vmem:[#allocation2] sm:$0xff] %v61
  %63 = vst [vmem:[#allocation2 + $0x8] sm:$0xff] %v60
  %64 = vst [vmem:[#allocation2 + $0x10] sm:$0xff] %v59
  %65 = vst [vmem:[#allocation2 + $0x18] sm:$0xff] %v58
  %66 = vst [vmem:[#allocation2 + $0x20] sm:$0xff] %v57
  %67 = vst [vmem:[#allocation2 + $0x28] sm:$0xff] %v56
  %68 = vrot.lane.b32.xlu0 %v20, 18
  %v69 = vpop.permute.xlu0 %68
  %70 = vrot.lane.b32.xlu0 %v21, 18
  %v71 = vpop.permute.xlu0 %70
  %72 = vrot.lane.b32.xlu0 %v22, 18
  %v73 = vpop.permute.xlu0 %72
  %74 = vrot.lane.b32.xlu0 %v23, 18
  %v75 = vpop.permute.xlu0 %74
  %76 = vrot.lane.b32.xlu0 %v24, 18
  %v77 = vpop.permute.xlu0 %76
  %78 = vrot.lane.b32.xlu0 %v25, 18
  %v79 = vpop.permute.xlu0 %78
  %vm80 = vcmp.lt.s32.totalorder %v54, 18
  %v81 = vsel %vm80, %v77, %v79
  %v82 = vsel %vm80, %v75, %v77
  %v83 = vsel %vm80, %v73, %v75
  %v84 = vsel %vm80, %v71, %v73
  %v85 = vsel %vm80, %v69, %v71
  %v86 = vsel %vm80, %v79, %v69
  %87 = vst [vmem:[#allocation2 + $0x30] sm:$0xff] %v86
  %88 = vst [vmem:[#allocation2 + $0x38] sm:$0xff] %v85
  %89 = vst [vmem:[#allocation2 + $0x40] sm:$0xff] %v84
  %90 = vst [vmem:[#allocation2 + $0x48] sm:$0xff] %v83
  %91 = vst [vmem:[#allocation2 + $0x50] sm:$0xff] %v82
  %92 = vst [vmem:[#allocation2 + $0x58] sm:$0xff] %v81
  %93 = vrot.lane.b32.xlu0 %v20, 17
  %v94 = vpop.permute.xlu0 %93
  %95 = vrot.lane.b32.xlu0 %v21, 17
  %v96 = vpop.permute.xlu0 %95
  %97 = vrot.lane.b32.xlu0 %v22, 17
  %v98 = vpop.permute.xlu0 %97
  %99 = vrot.lane.b32.xlu0 %v23, 17
  %v100 = vpop.permute.xlu0 %99
  %101 = vrot.lane.b32.xlu0 %v24, 17
  %v102 = vpop.permute.xlu0 %101
  %103 = vrot.lane.b32.xlu0 %v25, 17
  %v104 = vpop.permute.xlu0 %103
  %vm105 = vcmp.lt.s32.totalorder %v54, 17
  %v106 = vsel %vm105, %v102, %v104
  %v107 = vsel %vm105, %v100, %v102
  %v108 = vsel %vm105, %v98, %v100
  %v109 = vsel %vm105, %v96, %v98
  %v110 = vsel %vm105, %v94, %v96
  %v111 = vsel %vm105, %v104, %v94
  %112 = vst [vmem:[#allocation2 + $0x60] sm:$0xff] %v111
  %113 = vst [vmem:[#allocation2 + $0x68] sm:$0xff] %v110
  %114 = vst [vmem:[#allocation2 + $0x70] sm:$0xff] %v109
  %115 = vst [vmem:[#allocation2 + $0x78] sm:$0xff] %v108
  %116 = vst [vmem:[#allocation2 + $0x80] sm:$0xff] %v107
  %117 = vst [vmem:[#allocation2 + $0x88] sm:$0xff] %v106
  %118 = vrot.lane.b32.xlu0 %v20, 1
  %v119 = vpop.permute.xlu0 %118
  %120 = vrot.lane.b32.xlu0 %v21, 1
  %v121 = vpop.permute.xlu0 %120
  %122 = vrot.lane.b32.xlu0 %v22, 1
  %v123 = vpop.permute.xlu0 %122
  %124 = vrot.lane.b32.xlu0 %v23, 1
  %v125 = vpop.permute.xlu0 %124
  %126 = vrot.lane.b32.xlu0 %v24, 1
  %v127 = vpop.permute.xlu0 %126
  %128 = vrot.lane.b32.xlu0 %v25, 1
  %v129 = vpop.permute.xlu0 %128
  %vm130 = vcmp.lt.s32.totalorder %v54, 1
  %v131 = vsel %vm130, %v127, %v129
  %v132 = vsel %vm130, %v125, %v127
  %v133 = vsel %vm130, %v123, %v125
  %v134 = vsel %vm130, %v121, %v123
  %v135 = vsel %vm130, %v119, %v121
  %v136 = vsel %vm130, %v129, %v119
  %137 = vst [vmem:[#allocation2 + $0x90] sm:$0xff] %v136
  %138 = vst [vmem:[#allocation2 + $0x98] sm:$0xff] %v135
  %139 = vst [vmem:[#allocation2 + $0xa0] sm:$0xff] %v134
  %140 = vst [vmem:[#allocation2 + $0xa8] sm:$0xff] %v133
  %141 = vst [vmem:[#allocation2 + $0xb0] sm:$0xff] %v132
  %142 = vst [vmem:[#allocation2 + $0xb8] sm:$0xff] %v131
  %143 = vst [vmem:[#allocation2 + $0xc0] sm:$0xff] %v20
  %144 = vst [vmem:[#allocation2 + $0xc8] sm:$0xff] %v21
  %145 = vst [vmem:[#allocation2 + $0xd0] sm:$0xff] %v22
  %146 = vst [vmem:[#allocation2 + $0xd8] sm:$0xff] %v23
  %147 = vst [vmem:[#allocation2 + $0xe0] sm:$0xff] %v24
  %148 = vst [vmem:[#allocation2 + $0xe8] sm:$0xff] %v25
  %149 = vrot.lane.b32.xlu0 %v20, 127
  %v150 = vpop.permute.xlu0 %149
  %151 = vrot.lane.b32.xlu0 %v21, 127
  %v152 = vpop.permute.xlu0 %151
  %153 = vrot.lane.b32.xlu0 %v22, 127
  %v154 = vpop.permute.xlu0 %153
  %155 = vrot.lane.b32.xlu0 %v23, 127
  %v156 = vpop.permute.xlu0 %155
  %157 = vrot.lane.b32.xlu0 %v24, 127
  %v158 = vpop.permute.xlu0 %157
  %159 = vrot.lane.b32.xlu0 %v25, 127
  %v160 = vpop.permute.xlu0 %159
  %vm161 = vcmp.lt.s32.totalorder %v54, 127
  %v162 = vsel %vm161, %v158, %v160
  %v163 = vsel %vm161, %v156, %v158
  %v164 = vsel %vm161, %v154, %v156
  %v165 = vsel %vm161, %v152, %v154
  %v166 = vsel %vm161, %v150, %v152
  %v167 = vsel %vm161, %v160, %v150
  %168 = vst [vmem:[#allocation2 + $0xf0] sm:$0xff] %v166
  %169 = vst [vmem:[#allocation2 + $0xf8] sm:$0xff] %v165
  %170 = vst [vmem:[#allocation2 + $0x100] sm:$0xff] %v164
  %171 = vst [vmem:[#allocation2 + $0x108] sm:$0xff] %v163
  %172 = vst [vmem:[#allocation2 + $0x110] sm:$0xff] %v162
  %173 = vst [vmem:[#allocation2 + $0x118] sm:$0xff] %v167
  %174 = vrot.lane.b32.xlu0 %v20, 111
  %v175 = vpop.permute.xlu0 %174
  %176 = vrot.lane.b32.xlu0 %v21, 111
  %v177 = vpop.permute.xlu0 %176
  %178 = vrot.lane.b32.xlu0 %v22, 111
  %v179 = vpop.permute.xlu0 %178
  %180 = vrot.lane.b32.xlu0 %v23, 111
  %v181 = vpop.permute.xlu0 %180
  %182 = vrot.lane.b32.xlu0 %v24, 111
  %v183 = vpop.permute.xlu0 %182
  %184 = vrot.lane.b32.xlu0 %v25, 111
  %v185 = vpop.permute.xlu0 %184
  %vm186 = vcmp.lt.s32.totalorder %v54, 111
  %v187 = vsel %vm186, %v183, %v185
  %v188 = vsel %vm186, %v181, %v183
  %v189 = vsel %vm186, %v179, %v181
  %v190 = vsel %vm186, %v177, %v179
  %v191 = vsel %vm186, %v175, %v177
  %v192 = vsel %vm186, %v185, %v175
  %193 = vst [vmem:[#allocation2 + $0x120] sm:$0xff] %v191
  %194 = vst [vmem:[#allocation2 + $0x128] sm:$0xff] %v190
  %195 = vst [vmem:[#allocation2 + $0x130] sm:$0xff] %v189
  %196 = vst [vmem:[#allocation2 + $0x138] sm:$0xff] %v188
  %197 = vst [vmem:[#allocation2 + $0x140] sm:$0xff] %v187
  %198 = vst [vmem:[#allocation2 + $0x148] sm:$0xff] %v192
  %199 = vrot.lane.b32.xlu0 %v20, 110
  %v200 = vpop.permute.xlu0 %199
  %201 = vrot.lane.b32.xlu0 %v21, 110
  %v202 = vpop.permute.xlu0 %201
  %203 = vrot.lane.b32.xlu0 %v22, 110
  %v204 = vpop.permute.xlu0 %203
  %205 = vrot.lane.b32.xlu0 %v23, 110
  %v206 = vpop.permute.xlu0 %205
  %207 = vrot.lane.b32.xlu0 %v24, 110
  %v208 = vpop.permute.xlu0 %207
  %209 = vrot.lane.b32.xlu0 %v25, 110
  %v210 = vpop.permute.xlu0 %209
  %vm211 = vcmp.lt.s32.totalorder %v54, 110
  %v212 = vsel %vm211, %v208, %v210
  %v213 = vsel %vm211, %v206, %v208
  %v214 = vsel %vm211, %v204, %v206
  %v215 = vsel %vm211, %v202, %v204
  %v216 = vsel %vm211, %v200, %v202
  %v217 = vsel %vm211, %v210, %v200
  %218 = vst [vmem:[#allocation2 + $0x150] sm:$0xff] %v216
  %219 = vst [vmem:[#allocation2 + $0x158] sm:$0xff] %v215
  %220 = vst [vmem:[#allocation2 + $0x160] sm:$0xff] %v214
  %221 = vst [vmem:[#allocation2 + $0x168] sm:$0xff] %v213
  %222 = vst [vmem:[#allocation2 + $0x170] sm:$0xff] %v212
  %223 = vst [vmem:[#allocation2 + $0x178] sm:$0xff] %v217
  %224 = vrot.lane.b32.xlu0 %v20, 109
  %v225 = vpop.permute.xlu0 %224
  %226 = vrot.lane.b32.xlu0 %v21, 109
  %v227 = vpop.permute.xlu0 %226
  %228 = vrot.lane.b32.xlu0 %v22, 109
  %v229 = vpop.permute.xlu0 %228
  %230 = vrot.lane.b32.xlu0 %v23, 109
  %v231 = vpop.permute.xlu0 %230
  %232 = vrot.lane.b32.xlu0 %v24, 109
  %v233 = vpop.permute.xlu0 %232
  %234 = vrot.lane.b32.xlu0 %v25, 109
  %v235 = vpop.permute.xlu0 %234
  %vm236 = vcmp.lt.s32.totalorder %v54, 109
  %v237 = vsel %vm236, %v233, %v235
  %v238 = vsel %vm236, %v231, %v233
  %v239 = vsel %vm236, %v229, %v231
  %v240 = vsel %vm236, %v227, %v229
  %v241 = vsel %vm236, %v225, %v227
  %v242 = vsel %vm236, %v235, %v225
  %243 = vst [vmem:[#allocation2 + $0x180] sm:$0xff] %v241
  %244 = vst [vmem:[#allocation2 + $0x188] sm:$0xff] %v240
  %245 = vst [vmem:[#allocation2 + $0x190] sm:$0xff] %v239
  %246 = vst [vmem:[#allocation2 + $0x198] sm:$0xff] %v238
  %247 = vst [vmem:[#allocation2 + $0x1a0] sm:$0xff] %v237
  %248 = vst [vmem:[#allocation2 + $0x1a8] sm:$0xff] %v242
  %v249 = vld [vmem:[#allocation2] sm:$0xff]
  %v250 = vld [vmem:[#allocation2 + $0x8] sm:$0xff]
  %v251 = vld [vmem:[#allocation2 + $0x10] sm:$0xff]
  %v252 = vld [vmem:[#allocation2 + $0x18] sm:$0xff]
  %v253 = vld [vmem:[#allocation2 + $0x20] sm:$0xff]
  %v254 = vld [vmem:[#allocation2 + $0x28] sm:$0xff]
  %v255 = vld [vmem:[#allocation2 + $0x30] sm:$0xff]
  %v256 = vld [vmem:[#allocation2 + $0x38] sm:$0xff]
  %v257 = vld [vmem:[#allocation2 + $0x40] sm:$0xff]
  %v258 = vld [vmem:[#allocation2 + $0x48] sm:$0xff]
  %v259 = vld [vmem:[#allocation2 + $0x50] sm:$0xff]
  %v260 = vld [vmem:[#allocation2 + $0x58] sm:$0xff]
  %v261 = vld [vmem:[#allocation2 + $0x60] sm:$0xff]
  %v262 = vld [vmem:[#allocation2 + $0x68] sm:$0xff]
  %v263 = vld [vmem:[#allocation2 + $0x70] sm:$0xff]
  %v264 = vld [vmem:[#allocation2 + $0x78] sm:$0xff]
  %v265 = vld [vmem:[#allocation2 + $0x80] sm:$0xff]
  %v266 = vld [vmem:[#allocation2 + $0x88] sm:$0xff]
  %v267 = vld [vmem:[#allocation2 + $0x90] sm:$0xff]
  %v268 = vld [vmem:[#allocation2 + $0x98] sm:$0xff]
  %v269 = vld [vmem:[#allocation2 + $0xa0] sm:$0xff]
  %v270 = vld [vmem:[#allocation2 + $0xa8] sm:$0xff]
  %v271 = vld [vmem:[#allocation2 + $0xb0] sm:$0xff]
  %v272 = vld [vmem:[#allocation2 + $0xb8] sm:$0xff]
  %v273 = vld [vmem:[#allocation2 + $0xc0] sm:$0xff]
  %v274 = vld [vmem:[#allocation2 + $0xc8] sm:$0xff]
  %v275 = vld [vmem:[#allocation2 + $0xd0] sm:$0xff]
  %v276 = vld [vmem:[#allocation2 + $0xd8] sm:$0xff]
  %v277 = vld [vmem:[#allocation2 + $0xe0] sm:$0xff]
  %v278 = vld [vmem:[#allocation2 + $0xe8] sm:$0xff]
  %v279 = vld [vmem:[#allocation2 + $0xf0] sm:$0xff]
  %v280 = vld [vmem:[#allocation2 + $0xf8] sm:$0xff]
  %v281 = vld [vmem:[#allocation2 + $0x100] sm:$0xff]
  %v282 = vld [vmem:[#allocation2 + $0x108] sm:$0xff]
  %v283 = vld [vmem:[#allocation2 + $0x110] sm:$0xff]
  %v284 = vld [vmem:[#allocation2 + $0x118] sm:$0xff]
  %v285 = vld [vmem:[#allocation2 + $0x120] sm:$0xff]
  %v286 = vld [vmem:[#allocation2 + $0x128] sm:$0xff]
  %v287 = vld [vmem:[#allocation2 + $0x130] sm:$0xff]
  %v288 = vld [vmem:[#allocation2 + $0x138] sm:$0xff]
  %v289 = vld [vmem:[#allocation2 + $0x140] sm:$0xff]
  %v290 = vld [vmem:[#allocation2 + $0x148] sm:$0xff]
  %v291 = vld [vmem:[#allocation2 + $0x150] sm:$0xff]
  %v292 = vld [vmem:[#allocation2 + $0x158] sm:$0xff]
  %v293 = vld [vmem:[#allocation2 + $0x160] sm:$0xff]
  %v294 = vld [vmem:[#allocation2 + $0x168] sm:$0xff]
  %v295 = vld [vmem:[#allocation2 + $0x170] sm:$0xff]
  %v296 = vld [vmem:[#allocation2 + $0x178] sm:$0xff]
  %v297 = vld [vmem:[#allocation2 + $0x180] sm:$0xff]
  %v298 = vld [vmem:[#allocation2 + $0x188] sm:$0xff]
  %v299 = vld [vmem:[#allocation2 + $0x190] sm:$0xff]
  %v300 = vld [vmem:[#allocation2 + $0x198] sm:$0xff]
  %v301 = vld [vmem:[#allocation2 + $0x1a0] sm:$0xff]
  %v302 = vld [vmem:[#allocation2 + $0x1a8] sm:$0xff]
  %vm303 = vcmask 588800
  %v305 = vsel %vm303, %v39, 0
  %307 = vmatprep.subr.mxu0 %v250
  %308 = vmatpush1.msra.mxu0 %v249
  %309 = vmatprep.subr.mxu0 %v256
  %310 = vmatpush1.msra.mxu0 %v255
  %311 = vmatprep.subr.mxu0 %v262
  %312 = vmatpush1.msra.mxu0 %v261
  %313 = vmatprep.subr.mxu0 %v268
  %314 = vmatpush1.msra.mxu0 %v267
  %315 = vmatprep.subr.mxu0 %v274
  %316 = vmatpush1.msra.mxu0 %v273
  %317 = vmatprep.subr.mxu0 %v280
  %318 = vmatpush1.msra.mxu0 %v279
  %319 = vmatprep.subr.mxu0 %v286
  %320 = vmatpush1.msra.mxu0 %v285
  %321 = vmatprep.subr.mxu0 %v292
  %322 = vmatpush1.msra.mxu0 %v291
  %323 = vmatprep.subr.mxu0 %v298
  %324 = vmatpush1.msra.mxu0 %v297
  %325 = vmatprep.subr.mxu0 0.0
  %326 = vmatpush1.msra.mxu0 0.0
  %327 = vmatprep.subr.mxu0 0.0
  %328 = vmatpush1.msra.mxu0 0.0
  %329 = vmatprep.subr.mxu0 0.0
  %330 = vmatpush1.msra.mxu0 0.0
  %331 = vmatprep.subr.mxu0 0.0
  %332 = vmatpush1.msra.mxu0 0.0
  %333 = vmatprep.subr.mxu0 0.0
  %334 = vmatpush1.msra.mxu0 0.0
  %335 = vmatprep.subr.mxu0 0.0
  %336 = vmatpush1.msra.mxu0 0.0
  %337 = vmatprep.subr.mxu0 0.0
  %338 = vmatpush1.msra.mxu0 0.0
  %339 = vmatprep.subr.mxu0 0.0
  %340 = vmatpush1.msra.mxu0 0.0
  %341 = vmatprep.subr.mxu0 0.0
  %342 = vmatpush1.msra.mxu0 0.0
  %343 = vmatprep.subr.mxu0 0.0
  %344 = vmatpush1.msra.mxu0 0.0
  %345 = vmatprep.subr.mxu0 0.0
  %346 = vmatpush1.msra.mxu0 0.0
  %347 = vmatprep.subr.mxu0 0.0
  %348 = vmatpush1.msra.mxu0 0.0
  %349 = vmatprep.subr.mxu0 0.0
  %350 = vmatpush1.msra.mxu0 0.0
  %351 = vmatprep.subr.mxu0 0.0
  %352 = vmatpush1.msra.mxu0 0.0
  %353 = vmatprep.subr.mxu0 0.0
  %354 = vmatpush1.msra.mxu0 0.0
  %355 = vmatprep.subr.mxu0 0.0
  %356 = vmatpush1.msra.mxu0 0.0
  %357 = vmatprep.subr.mxu0 0.0
  %358 = vmatpush1.msra.mxu0 0.0
  %359 = vmatprep.subr.mxu0 0.0
  %360 = vmatpush1.msra.mxu0 0.0
  %361 = vmatprep.subr.mxu0 0.0
  %362 = vmatpush1.msra.mxu0 0.0
  %363 = vmatprep.subr.mxu0 0.0
  %364 = vmatpush1.msra.mxu0 0.0
  %365 = vmatprep.subr.mxu0 0.0
  %366 = vmatpush1.msra.mxu0 0.0
  %367 = vmatprep.subr.mxu0 0.0
  %368 = vmatpush1.msra.mxu0 0.0
  %369 = vmatprep.subr.mxu0 0.0
  %370 = vmatpush1.msra.mxu0 0.0
  %371 = vmatprep.mubr.f32.mxu0 0.0
  %372 = vmatmul.mubr.f32.gmra.mrb[0].mxu0 %v305
  %v373 = vpop.f32.mrb[0].mxu0
  %v374 = vadd.f32 0.0, %v373
  %v375 = vpop.f32.mrb[0].mxu0
  %v376 = vadd.f32 0.0, %v375
  %377 = vdwg.mxu0
  %378 = vmatprep.subr.mxu0 %v252
  %379 = vmatpush1.msra.mxu0 %v251
  %380 = vmatprep.subr.mxu0 %v258
  %381 = vmatpush1.msra.mxu0 %v257
  %382 = vmatprep.subr.mxu0 %v264
  %383 = vmatpush1.msra.mxu0 %v263
  %384 = vmatprep.subr.mxu0 %v270
  %385 = vmatpush1.msra.mxu0 %v269
  %386 = vmatprep.subr.mxu0 %v276
  %387 = vmatpush1.msra.mxu0 %v275
  %388 = vmatprep.subr.mxu0 %v282
  %389 = vmatpush1.msra.mxu0 %v281
  %390 = vmatprep.subr.mxu0 %v288
  %391 = vmatpush1.msra.mxu0 %v287
  %392 = vmatprep.subr.mxu0 %v294
  %393 = vmatpush1.msra.mxu0 %v293
  %394 = vmatprep.subr.mxu0 %v300
  %395 = vmatpush1.msra.mxu0 %v299
  %396 = vmatprep.subr.mxu0 0.0
  %397 = vmatpush1.msra.mxu0 0.0
  %398 = vmatprep.subr.mxu0 0.0
  %399 = vmatpush1.msra.mxu0 0.0
  %400 = vmatprep.subr.mxu0 0.0
  %401 = vmatpush1.msra.mxu0 0.0
  %402 = vmatprep.subr.mxu0 0.0
  %403 = vmatpush1.msra.mxu0 0.0
  %404 = vmatprep.subr.mxu0 0.0
  %405 = vmatpush1.msra.mxu0 0.0
  %406 = vmatprep.subr.mxu0 0.0
  %407 = vmatpush1.msra.mxu0 0.0
  %408 = vmatprep.subr.mxu0 0.0
  %409 = vmatpush1.msra.mxu0 0.0
  %410 = vmatprep.subr.mxu0 0.0
  %411 = vmatpush1.msra.mxu0 0.0
  %412 = vmatprep.subr.mxu0 0.0
  %413 = vmatpush1.msra.mxu0 0.0
  %414 = vmatprep.subr.mxu0 0.0
  %415 = vmatpush1.msra.mxu0 0.0
  %416 = vmatprep.subr.mxu0 0.0
  %417 = vmatpush1.msra.mxu0 0.0
  %418 = vmatprep.subr.mxu0 0.0
  %419 = vmatpush1.msra.mxu0 0.0
  %420 = vmatprep.subr.mxu0 0.0
  %421 = vmatpush1.msra.mxu0 0.0
  %422 = vmatprep.subr.mxu0 0.0
  %423 = vmatpush1.msra.mxu0 0.0
  %424 = vmatprep.subr.mxu0 0.0
  %425 = vmatpush1.msra.mxu0 0.0
  %426 = vmatprep.subr.mxu0 0.0
  %427 = vmatpush1.msra.mxu0 0.0
  %428 = vmatprep.subr.mxu0 0.0
  %429 = vmatpush1.msra.mxu0 0.0
  %430 = vmatprep.subr.mxu0 0.0
  %431 = vmatpush1.msra.mxu0 0.0
  %432 = vmatprep.subr.mxu0 0.0
  %433 = vmatpush1.msra.mxu0 0.0
  %434 = vmatprep.subr.mxu0 0.0
  %435 = vmatpush1.msra.mxu0 0.0
  %436 = vmatprep.subr.mxu0 0.0
  %437 = vmatpush1.msra.mxu0 0.0
  %438 = vmatprep.subr.mxu0 0.0
  %439 = vmatpush1.msra.mxu0 0.0
  %440 = vmatprep.subr.mxu0 0.0
  %441 = vmatpush1.msra.mxu0 0.0
  %442 = vmatprep.mubr.f32.mxu0 0.0
  %443 = vmatmul.mubr.f32.gmra.mrb[0].mxu0 %v305
  %v444 = vpop.f32.mrb[0].mxu0
  %v445 = vadd.f32 0.0, %v444
  %v446 = vpop.f32.mrb[0].mxu0
  %v447 = vadd.f32 0.0, %v446
  %448 = vdwg.mxu0
  %449 = vmatprep.subr.mxu0 %v254
  %450 = vmatpush1.msra.mxu0 %v253
  %451 = vmatprep.subr.mxu0 %v260
  %452 = vmatpush1.msra.mxu0 %v259
  %453 = vmatprep.subr.mxu0 %v266
  %454 = vmatpush1.msra.mxu0 %v265
  %455 = vmatprep.subr.mxu0 %v272
  %456 = vmatpush1.msra.mxu0 %v271
  %457 = vmatprep.subr.mxu0 %v278
  %458 = vmatpush1.msra.mxu0 %v277
  %459 = vmatprep.subr.mxu0 %v284
  %460 = vmatpush1.msra.mxu0 %v283
  %461 = vmatprep.subr.mxu0 %v290
  %462 = vmatpush1.msra.mxu0 %v289
  %463 = vmatprep.subr.mxu0 %v296
  %464 = vmatpush1.msra.mxu0 %v295
  %465 = vmatprep.subr.mxu0 %v302
  %466 = vmatpush1.msra.mxu0 %v301
  %467 = vmatprep.subr.mxu0 0.0
  %468 = vmatpush1.msra.mxu0 0.0
  %469 = vmatprep.subr.mxu0 0.0
  %470 = vmatpush1.msra.mxu0 0.0
  %471 = vmatprep.subr.mxu0 0.0
  %472 = vmatpush1.msra.mxu0 0.0
  %473 = vmatprep.subr.mxu0 0.0
  %474 = vmatpush1.msra.mxu0 0.0
  %475 = vmatprep.subr.mxu0 0.0
  %476 = vmatpush1.msra.mxu0 0.0
  %477 = vmatprep.subr.mxu0 0.0
  %478 = vmatpush1.msra.mxu0 0.0
  %479 = vmatprep.subr.mxu0 0.0
  %480 = vmatpush1.msra.mxu0 0.0
  %481 = vmatprep.subr.mxu0 0.0
  %482 = vmatpush1.msra.mxu0 0.0
  %483 = vmatprep.subr.mxu0 0.0
  %484 = vmatpush1.msra.mxu0 0.0
  %485 = vmatprep.subr.mxu0 0.0
  %486 = vmatpush1.msra.mxu0 0.0
  %487 = vmatprep.subr.mxu0 0.0
  %488 = vmatpush1.msra.mxu0 0.0
  %489 = vmatprep.subr.mxu0 0.0
  %490 = vmatpush1.msra.mxu0 0.0
  %491 = vmatprep.subr.mxu0 0.0
  %492 = vmatpush1.msra.mxu0 0.0
  %493 = vmatprep.subr.mxu0 0.0
  %494 = vmatpush1.msra.mxu0 0.0
  %495 = vmatprep.subr.mxu0 0.0
  %496 = vmatpush1.msra.mxu0 0.0
  %497 = vmatprep.subr.mxu0 0.0
  %498 = vmatpush1.msra.mxu0 0.0
  %499 = vmatprep.subr.mxu0 0.0
  %500 = vmatpush1.msra.mxu0 0.0
  %501 = vmatprep.subr.mxu0 0.0
  %502 = vmatpush1.msra.mxu0 0.0
  %503 = vmatprep.subr.mxu0 0.0
  %504 = vmatpush1.msra.mxu0 0.0
  %505 = vmatprep.subr.mxu0 0.0
  %506 = vmatpush1.msra.mxu0 0.0
  %507 = vmatprep.subr.mxu0 0.0
  %508 = vmatpush1.msra.mxu0 0.0
  %509 = vmatprep.subr.mxu0 0.0
  %510 = vmatpush1.msra.mxu0 0.0
  %511 = vmatprep.subr.mxu0 0.0
  %512 = vmatpush1.msra.mxu0 0.0
  %513 = vmatprep.mubr.f32.mxu0 0.0
  %514 = vmatmul.mubr.f32.gmra.mrb[0].mxu0 %v305
  %v515 = vpop.f32.mrb[0].mxu0
  %v516 = vadd.f32 0.0, %v515
  %v517 = vpop.f32.mrb[0].mxu0
  %v518 = vadd.f32 0.0, %v517
  %519 = vdwg.mxu0
  %v520 = vsub.f32 %v26, %v374
  %v521 = vsub.f32 %v27, %v376
  %v522 = vsub.f32 %v28, %v445
  %v523 = vsub.f32 %v29, %v447
  %v524 = vsub.f32 %v30, %v516
  %v525 = vsub.f32 %v31, %v518
  %v526 = vmul.f32 %v520, %v32
  %v527 = vmul.f32 %v521, %v33
  %v528 = vmul.f32 %v522, %v34
  %v529 = vmul.f32 %v523, %v35
  %v530 = vmul.f32 %v524, %v36
  %v531 = vmul.f32 %v525, %v37
  %v532 = vmul.f32 %v526, %v520
  %v533 = vmul.f32 %v527, %v521
  %v534 = vmul.f32 %v528, %v522
  %v535 = vmul.f32 %v529, %v523
  %v536 = vmul.f32 %v530, %v524
  %v537 = vmul.f32 %v531, %v525
  %v538 = vadd.f32 %v526, %v527
  %v539 = vadd.f32 %v538, %v528
  %v540 = vadd.f32 %v539, %v529
  %v541 = vadd.f32 %v540, %v530
  %v542 = vadd.f32 %v541, %v531
  %543 = vadd.xlane.f32.xlu0 %v542
  %v544 = vpop.xlane.xlu0 %543
  %v545 = vadd.f32 %v532, %v533
  %v546 = vadd.f32 %v545, %v534
  %v547 = vadd.f32 %v546, %v535
  %v548 = vadd.f32 %v547, %v536
  %v549 = vadd.f32 %v548, %v537
  %550 = vadd.xlane.f32.xlu0 %v549
  %v551 = vpop.xlane.xlu0 %550
  %v552 = vmul.f32 %v544, 0.001953125
  %v553 = vmul.f32 %v551, 0.001953125
  %v554 = vmul.f32 %v552, %v552
  %v555 = vsub.f32 %v553, %v554
  %v556 = vmax.f32 %v555, 0.0
  %v557 = vsub.f32 %v520, %v552
  %v558 = vsub.f32 %v521, %v552
  %v559 = vsub.f32 %v522, %v552
  %v560 = vsub.f32 %v523, %v552
  %v561 = vsub.f32 %v524, %v552
  %v562 = vsub.f32 %v525, %v552
  %v563 = vadd.f32 %v556, 1e-05
  %v564 = vrsqrt.pop %v563
  %v565 = vmul.f32 %v557, %v564
  %v566 = vmul.f32 %v558, %v564
  %v567 = vmul.f32 %v559, %v564
  %v568 = vmul.f32 %v560, %v564
  %v569 = vmul.f32 %v561, %v564
  %v570 = vmul.f32 %v562, %v564
  %572 = vset.pattern.permute.xlu0 0
  %573 = vperm.xlu0 %572, %v38
  %v574 = vpop.permute.xlu0 %573
  %v576 = vmul.f32 %v565, %v574
  %v577 = vmul.f32 %v566, %v574
  %v578 = vmul.f32 %v567, %v574
  %v579 = vmul.f32 %v568, %v574
  %v580 = vmul.f32 %v569, %v574
  %v581 = vmul.f32 %v570, %v574
  %582 = vset.pattern.permute.xlu0 1
  %583 = vperm.xlu0 %582, %v38
  %v584 = vpop.permute.xlu0 %583
  %v586 = vadd.f32 %v576, %v584
  %v587 = vadd.f32 %v577, %v584
  %v588 = vadd.f32 %v578, %v584
  %v589 = vadd.f32 %v579, %v584
  %v590 = vadd.f32 %v580, %v584
  %v591 = vadd.f32 %v581, %v584
  %v592 = vmax.f32 %v586, 0.0
  %v593 = vmax.f32 %v587, 0.0
  %v594 = vmax.f32 %v588, 0.0
  %v595 = vmax.f32 %v589, 0.0
  %v596 = vmax.f32 %v590, 0.0
  %v597 = vmax.f32 %v591, 0.0
  %v598 = vmul.f32 %v592, %v32
  %v599 = vmul.f32 %v593, %v33
  %v600 = vmul.f32 %v594, %v34
  %v601 = vmul.f32 %v595, %v35
  %v602 = vmul.f32 %v596, %v36
  %v603 = vmul.f32 %v597, %v37
  %604 = vrot.lane.b32.xlu0 %v598, 19
  %v605 = vpop.permute.xlu0 %604
  %606 = vrot.lane.b32.xlu0 %v599, 19
  %v607 = vpop.permute.xlu0 %606
  %608 = vrot.lane.b32.xlu0 %v600, 19
  %v609 = vpop.permute.xlu0 %608
  %610 = vrot.lane.b32.xlu0 %v601, 19
  %v611 = vpop.permute.xlu0 %610
  %612 = vrot.lane.b32.xlu0 %v602, 19
  %v613 = vpop.permute.xlu0 %612
  %614 = vrot.lane.b32.xlu0 %v603, 19
  %v615 = vpop.permute.xlu0 %614
  %v616 = vsel %vm55, %v613, %v615
  %v617 = vsel %vm55, %v611, %v613
  %v618 = vsel %vm55, %v609, %v611
  %v619 = vsel %vm55, %v607, %v609
  %v620 = vsel %vm55, %v605, %v607
  %v621 = vsel %vm55, %v615, %v605
  %622 = vst [vmem:[#allocation2] sm:$0xff] %v621
  %623 = vst [vmem:[#allocation2 + $0x8] sm:$0xff] %v620
  %624 = vst [vmem:[#allocation2 + $0x10] sm:$0xff] %v619
  %625 = vst [vmem:[#allocation2 + $0x18] sm:$0xff] %v618
  %626 = vst [vmem:[#allocation2 + $0x20] sm:$0xff] %v617
  %627 = vst [vmem:[#allocation2 + $0x28] sm:$0xff] %v616
  %628 = vrot.lane.b32.xlu0 %v598, 18
  %v629 = vpop.permute.xlu0 %628
  %630 = vrot.lane.b32.xlu0 %v599, 18
  %v631 = vpop.permute.xlu0 %630
  %632 = vrot.lane.b32.xlu0 %v600, 18
  %v633 = vpop.permute.xlu0 %632
  %634 = vrot.lane.b32.xlu0 %v601, 18
  %v635 = vpop.permute.xlu0 %634
  %636 = vrot.lane.b32.xlu0 %v602, 18
  %v637 = vpop.permute.xlu0 %636
  %638 = vrot.lane.b32.xlu0 %v603, 18
  %v639 = vpop.permute.xlu0 %638
  %v640 = vsel %vm80, %v637, %v639
  %v641 = vsel %vm80, %v635, %v637
  %v642 = vsel %vm80, %v633, %v635
  %v643 = vsel %vm80, %v631, %v633
  %v644 = vsel %vm80, %v629, %v631
  %v645 = vsel %vm80, %v639, %v629
  %646 = vst [vmem:[#allocation2 + $0x30] sm:$0xff] %v645
  %647 = vst [vmem:[#allocation2 + $0x38] sm:$0xff] %v644
  %648 = vst [vmem:[#allocation2 + $0x40] sm:$0xff] %v643
  %649 = vst [vmem:[#allocation2 + $0x48] sm:$0xff] %v642
  %650 = vst [vmem:[#allocation2 + $0x50] sm:$0xff] %v641
  %651 = vst [vmem:[#allocation2 + $0x58] sm:$0xff] %v640
  %652 = vrot.lane.b32.xlu0 %v598, 17
  %v653 = vpop.permute.xlu0 %652
  %654 = vrot.lane.b32.xlu0 %v599, 17
  %v655 = vpop.permute.xlu0 %654
  %656 = vrot.lane.b32.xlu0 %v600, 17
  %v657 = vpop.permute.xlu0 %656
  %658 = vrot.lane.b32.xlu0 %v601, 17
  %v659 = vpop.permute.xlu0 %658
  %660 = vrot.lane.b32.xlu0 %v602, 17
  %v661 = vpop.permute.xlu0 %660
  %662 = vrot.lane.b32.xlu0 %v603, 17
  %v663 = vpop.permute.xlu0 %662
  %v664 = vsel %vm105, %v661, %v663
  %v665 = vsel %vm105, %v659, %v661
  %v666 = vsel %vm105, %v657, %v659
  %v667 = vsel %vm105, %v655, %v657
  %v668 = vsel %vm105, %v653, %v655
  %v669 = vsel %vm105, %v663, %v653
  %670 = vst [vmem:[#allocation2 + $0x60] sm:$0xff] %v669
  %671 = vst [vmem:[#allocation2 + $0x68] sm:$0xff] %v668
  %672 = vst [vmem:[#allocation2 + $0x70] sm:$0xff] %v667
  %673 = vst [vmem:[#allocation2 + $0x78] sm:$0xff] %v666
  %674 = vst [vmem:[#allocation2 + $0x80] sm:$0xff] %v665
  %675 = vst [vmem:[#allocation2 + $0x88] sm:$0xff] %v664
  %676 = vrot.lane.b32.xlu0 %v598, 1
  %v677 = vpop.permute.xlu0 %676
  %678 = vrot.lane.b32.xlu0 %v599, 1
  %v679 = vpop.permute.xlu0 %678
  %680 = vrot.lane.b32.xlu0 %v600, 1
  %v681 = vpop.permute.xlu0 %680
  %682 = vrot.lane.b32.xlu0 %v601, 1
  %v683 = vpop.permute.xlu0 %682
  %684 = vrot.lane.b32.xlu0 %v602, 1
  %v685 = vpop.permute.xlu0 %684
  %686 = vrot.lane.b32.xlu0 %v603, 1
  %v687 = vpop.permute.xlu0 %686
  %v688 = vsel %vm130, %v685, %v687
  %v689 = vsel %vm130, %v683, %v685
  %v690 = vsel %vm130, %v681, %v683
  %v691 = vsel %vm130, %v679, %v681
  %v692 = vsel %vm130, %v677, %v679
  %v693 = vsel %vm130, %v687, %v677
  %694 = vst [vmem:[#allocation2 + $0x90] sm:$0xff] %v693
  %695 = vst [vmem:[#allocation2 + $0x98] sm:$0xff] %v692
  %696 = vst [vmem:[#allocation2 + $0xa0] sm:$0xff] %v691
  %697 = vst [vmem:[#allocation2 + $0xa8] sm:$0xff] %v690
  %698 = vst [vmem:[#allocation2 + $0xb0] sm:$0xff] %v689
  %699 = vst [vmem:[#allocation2 + $0xb8] sm:$0xff] %v688
  %700 = vst [vmem:[#allocation2 + $0xc0] sm:$0xff] %v598
  %701 = vst [vmem:[#allocation2 + $0xc8] sm:$0xff] %v599
  %702 = vst [vmem:[#allocation2 + $0xd0] sm:$0xff] %v600
  %703 = vst [vmem:[#allocation2 + $0xd8] sm:$0xff] %v601
  %704 = vst [vmem:[#allocation2 + $0xe0] sm:$0xff] %v602
  %705 = vst [vmem:[#allocation2 + $0xe8] sm:$0xff] %v603
  %706 = vrot.lane.b32.xlu0 %v598, 127
  %v707 = vpop.permute.xlu0 %706
  %708 = vrot.lane.b32.xlu0 %v599, 127
  %v709 = vpop.permute.xlu0 %708
  %710 = vrot.lane.b32.xlu0 %v600, 127
  %v711 = vpop.permute.xlu0 %710
  %712 = vrot.lane.b32.xlu0 %v601, 127
  %v713 = vpop.permute.xlu0 %712
  %714 = vrot.lane.b32.xlu0 %v602, 127
  %v715 = vpop.permute.xlu0 %714
  %716 = vrot.lane.b32.xlu0 %v603, 127
  %v717 = vpop.permute.xlu0 %716
  %v718 = vsel %vm161, %v715, %v717
  %v719 = vsel %vm161, %v713, %v715
  %v720 = vsel %vm161, %v711, %v713
  %v721 = vsel %vm161, %v709, %v711
  %v722 = vsel %vm161, %v707, %v709
  %v723 = vsel %vm161, %v717, %v707
  %724 = vst [vmem:[#allocation2 + $0xf0] sm:$0xff] %v722
  %725 = vst [vmem:[#allocation2 + $0xf8] sm:$0xff] %v721
  %726 = vst [vmem:[#allocation2 + $0x100] sm:$0xff] %v720
  %727 = vst [vmem:[#allocation2 + $0x108] sm:$0xff] %v719
  %728 = vst [vmem:[#allocation2 + $0x110] sm:$0xff] %v718
  %729 = vst [vmem:[#allocation2 + $0x118] sm:$0xff] %v723
  %730 = vrot.lane.b32.xlu0 %v598, 111
  %v731 = vpop.permute.xlu0 %730
  %732 = vrot.lane.b32.xlu0 %v599, 111
  %v733 = vpop.permute.xlu0 %732
  %734 = vrot.lane.b32.xlu0 %v600, 111
  %v735 = vpop.permute.xlu0 %734
  %736 = vrot.lane.b32.xlu0 %v601, 111
  %v737 = vpop.permute.xlu0 %736
  %738 = vrot.lane.b32.xlu0 %v602, 111
  %v739 = vpop.permute.xlu0 %738
  %740 = vrot.lane.b32.xlu0 %v603, 111
  %v741 = vpop.permute.xlu0 %740
  %v742 = vsel %vm186, %v739, %v741
  %v743 = vsel %vm186, %v737, %v739
  %v744 = vsel %vm186, %v735, %v737
  %v745 = vsel %vm186, %v733, %v735
  %v746 = vsel %vm186, %v731, %v733
  %v747 = vsel %vm186, %v741, %v731
  %748 = vst [vmem:[#allocation2 + $0x120] sm:$0xff] %v746
  %749 = vst [vmem:[#allocation2 + $0x128] sm:$0xff] %v745
  %750 = vst [vmem:[#allocation2 + $0x130] sm:$0xff] %v744
  %751 = vst [vmem:[#allocation2 + $0x138] sm:$0xff] %v743
  %752 = vst [vmem:[#allocation2 + $0x140] sm:$0xff] %v742
  %753 = vst [vmem:[#allocation2 + $0x148] sm:$0xff] %v747
  %754 = vrot.lane.b32.xlu0 %v598, 110
  %v755 = vpop.permute.xlu0 %754
  %756 = vrot.lane.b32.xlu0 %v599, 110
  %v757 = vpop.permute.xlu0 %756
  %758 = vrot.lane.b32.xlu0 %v600, 110
  %v759 = vpop.permute.xlu0 %758
  %760 = vrot.lane.b32.xlu0 %v601, 110
  %v761 = vpop.permute.xlu0 %760
  %762 = vrot.lane.b32.xlu0 %v602, 110
  %v763 = vpop.permute.xlu0 %762
  %764 = vrot.lane.b32.xlu0 %v603, 110
  %v765 = vpop.permute.xlu0 %764
  %v766 = vsel %vm211, %v763, %v765
  %v767 = vsel %vm211, %v761, %v763
  %v768 = vsel %vm211, %v759, %v761
  %v769 = vsel %vm211, %v757, %v759
  %v770 = vsel %vm211, %v755, %v757
  %v771 = vsel %vm211, %v765, %v755
  %772 = vst [vmem:[#allocation2 + $0x150] sm:$0xff] %v770
  %773 = vst [vmem:[#allocation2 + $0x158] sm:$0xff] %v769
  %774 = vst [vmem:[#allocation2 + $0x160] sm:$0xff] %v768
  %775 = vst [vmem:[#allocation2 + $0x168] sm:$0xff] %v767
  %776 = vst [vmem:[#allocation2 + $0x170] sm:$0xff] %v766
  %777 = vst [vmem:[#allocation2 + $0x178] sm:$0xff] %v771
  %778 = vrot.lane.b32.xlu0 %v598, 109
  %v779 = vpop.permute.xlu0 %778
  %780 = vrot.lane.b32.xlu0 %v599, 109
  %v781 = vpop.permute.xlu0 %780
  %782 = vrot.lane.b32.xlu0 %v600, 109
  %v783 = vpop.permute.xlu0 %782
  %784 = vrot.lane.b32.xlu0 %v601, 109
  %v785 = vpop.permute.xlu0 %784
  %786 = vrot.lane.b32.xlu0 %v602, 109
  %v787 = vpop.permute.xlu0 %786
  %788 = vrot.lane.b32.xlu0 %v603, 109
  %v789 = vpop.permute.xlu0 %788
  %v790 = vsel %vm236, %v787, %v789
  %v791 = vsel %vm236, %v785, %v787
  %v792 = vsel %vm236, %v783, %v785
  %v793 = vsel %vm236, %v781, %v783
  %v794 = vsel %vm236, %v779, %v781
  %v795 = vsel %vm236, %v789, %v779
  %796 = vst [vmem:[#allocation2 + $0x180] sm:$0xff] %v794
  %797 = vst [vmem:[#allocation2 + $0x188] sm:$0xff] %v793
  %798 = vst [vmem:[#allocation2 + $0x190] sm:$0xff] %v792
  %799 = vst [vmem:[#allocation2 + $0x198] sm:$0xff] %v791
  %800 = vst [vmem:[#allocation2 + $0x1a0] sm:$0xff] %v790
  %801 = vst [vmem:[#allocation2 + $0x1a8] sm:$0xff] %v795
  %v802 = vld [vmem:[#allocation2] sm:$0xff]
  %v803 = vld [vmem:[#allocation2 + $0x8] sm:$0xff]
  %v804 = vld [vmem:[#allocation2 + $0x10] sm:$0xff]
  %v805 = vld [vmem:[#allocation2 + $0x18] sm:$0xff]
  %v806 = vld [vmem:[#allocation2 + $0x20] sm:$0xff]
  %v807 = vld [vmem:[#allocation2 + $0x28] sm:$0xff]
  %v808 = vld [vmem:[#allocation2 + $0x30] sm:$0xff]
  %v809 = vld [vmem:[#allocation2 + $0x38] sm:$0xff]
  %v810 = vld [vmem:[#allocation2 + $0x40] sm:$0xff]
  %v811 = vld [vmem:[#allocation2 + $0x48] sm:$0xff]
  %v812 = vld [vmem:[#allocation2 + $0x50] sm:$0xff]
  %v813 = vld [vmem:[#allocation2 + $0x58] sm:$0xff]
  %v814 = vld [vmem:[#allocation2 + $0x60] sm:$0xff]
  %v815 = vld [vmem:[#allocation2 + $0x68] sm:$0xff]
  %v816 = vld [vmem:[#allocation2 + $0x70] sm:$0xff]
  %v817 = vld [vmem:[#allocation2 + $0x78] sm:$0xff]
  %v818 = vld [vmem:[#allocation2 + $0x80] sm:$0xff]
  %v819 = vld [vmem:[#allocation2 + $0x88] sm:$0xff]
  %v820 = vld [vmem:[#allocation2 + $0x90] sm:$0xff]
  %v821 = vld [vmem:[#allocation2 + $0x98] sm:$0xff]
  %v822 = vld [vmem:[#allocation2 + $0xa0] sm:$0xff]
  %v823 = vld [vmem:[#allocation2 + $0xa8] sm:$0xff]
  %v824 = vld [vmem:[#allocation2 + $0xb0] sm:$0xff]
  %v825 = vld [vmem:[#allocation2 + $0xb8] sm:$0xff]
  %v826 = vld [vmem:[#allocation2 + $0xc0] sm:$0xff]
  %v827 = vld [vmem:[#allocation2 + $0xc8] sm:$0xff]
  %v828 = vld [vmem:[#allocation2 + $0xd0] sm:$0xff]
  %v829 = vld [vmem:[#allocation2 + $0xd8] sm:$0xff]
  %v830 = vld [vmem:[#allocation2 + $0xe0] sm:$0xff]
  %v831 = vld [vmem:[#allocation2 + $0xe8] sm:$0xff]
  %v832 = vld [vmem:[#allocation2 + $0xf0] sm:$0xff]
  %v833 = vld [vmem:[#allocation2 + $0xf8] sm:$0xff]
  %v834 = vld [vmem:[#allocation2 + $0x100] sm:$0xff]
  %v835 = vld [vmem:[#allocation2 + $0x108] sm:$0xff]
  %v836 = vld [vmem:[#allocation2 + $0x110] sm:$0xff]
  %v837 = vld [vmem:[#allocation2 + $0x118] sm:$0xff]
  %v838 = vld [vmem:[#allocation2 + $0x120] sm:$0xff]
  %v839 = vld [vmem:[#allocation2 + $0x128] sm:$0xff]
  %v840 = vld [vmem:[#allocation2 + $0x130] sm:$0xff]
  %v841 = vld [vmem:[#allocation2 + $0x138] sm:$0xff]
  %v842 = vld [vmem:[#allocation2 + $0x140] sm:$0xff]
  %v843 = vld [vmem:[#allocation2 + $0x148] sm:$0xff]
  %v844 = vld [vmem:[#allocation2 + $0x150] sm:$0xff]
  %v845 = vld [vmem:[#allocation2 + $0x158] sm:$0xff]
  %v846 = vld [vmem:[#allocation2 + $0x160] sm:$0xff]
  %v847 = vld [vmem:[#allocation2 + $0x168] sm:$0xff]
  %v848 = vld [vmem:[#allocation2 + $0x170] sm:$0xff]
  %v849 = vld [vmem:[#allocation2 + $0x178] sm:$0xff]
  %v850 = vld [vmem:[#allocation2 + $0x180] sm:$0xff]
  %v851 = vld [vmem:[#allocation2 + $0x188] sm:$0xff]
  %v852 = vld [vmem:[#allocation2 + $0x190] sm:$0xff]
  %v853 = vld [vmem:[#allocation2 + $0x198] sm:$0xff]
  %v854 = vld [vmem:[#allocation2 + $0x1a0] sm:$0xff]
  %v855 = vld [vmem:[#allocation2 + $0x1a8] sm:$0xff]
  %v857 = vsel %vm303, %v40, 0
  %859 = vmatprep.subr.mxu0 %v803
  %860 = vmatpush1.msra.mxu0 %v802
  %861 = vmatprep.subr.mxu0 %v809
  %862 = vmatpush1.msra.mxu0 %v808
  %863 = vmatprep.subr.mxu0 %v815
  %864 = vmatpush1.msra.mxu0 %v814
  %865 = vmatprep.subr.mxu0 %v821
  %866 = vmatpush1.msra.mxu0 %v820
  %867 = vmatprep.subr.mxu0 %v827
  %868 = vmatpush1.msra.mxu0 %v826
  %869 = vmatprep.subr.mxu0 %v833
  %870 = vmatpush1.msra.mxu0 %v832
  %871 = vmatprep.subr.mxu0 %v839
  %872 = vmatpush1.msra.mxu0 %v838
  %873 = vmatprep.subr.mxu0 %v845
  %874 = vmatpush1.msra.mxu0 %v844
  %875 = vmatprep.subr.mxu0 %v851
  %876 = vmatpush1.msra.mxu0 %v850
  %877 = vmatprep.subr.mxu0 0.0
  %878 = vmatpush1.msra.mxu0 0.0
  %879 = vmatprep.subr.mxu0 0.0
  %880 = vmatpush1.msra.mxu0 0.0
  %881 = vmatprep.subr.mxu0 0.0
  %882 = vmatpush1.msra.mxu0 0.0
  %883 = vmatprep.subr.mxu0 0.0
  %884 = vmatpush1.msra.mxu0 0.0
  %885 = vmatprep.subr.mxu0 0.0
  %886 = vmatpush1.msra.mxu0 0.0
  %887 = vmatprep.subr.mxu0 0.0
  %888 = vmatpush1.msra.mxu0 0.0
  %889 = vmatprep.subr.mxu0 0.0
  %890 = vmatpush1.msra.mxu0 0.0
  %891 = vmatprep.subr.mxu0 0.0
  %892 = vmatpush1.msra.mxu0 0.0
  %893 = vmatprep.subr.mxu0 0.0
  %894 = vmatpush1.msra.mxu0 0.0
  %895 = vmatprep.subr.mxu0 0.0
  %896 = vmatpush1.msra.mxu0 0.0
  %897 = vmatprep.subr.mxu0 0.0
  %898 = vmatpush1.msra.mxu0 0.0
  %899 = vmatprep.subr.mxu0 0.0
  %900 = vmatpush1.msra.mxu0 0.0
  %901 = vmatprep.subr.mxu0 0.0
  %902 = vmatpush1.msra.mxu0 0.0
  %903 = vmatprep.subr.mxu0 0.0
  %904 = vmatpush1.msra.mxu0 0.0
  %905 = vmatprep.subr.mxu0 0.0
  %906 = vmatpush1.msra.mxu0 0.0
  %907 = vmatprep.subr.mxu0 0.0
  %908 = vmatpush1.msra.mxu0 0.0
  %909 = vmatprep.subr.mxu0 0.0
  %910 = vmatpush1.msra.mxu0 0.0
  %911 = vmatprep.subr.mxu0 0.0
  %912 = vmatpush1.msra.mxu0 0.0
  %913 = vmatprep.subr.mxu0 0.0
  %914 = vmatpush1.msra.mxu0 0.0
  %915 = vmatprep.subr.mxu0 0.0
  %916 = vmatpush1.msra.mxu0 0.0
  %917 = vmatprep.subr.mxu0 0.0
  %918 = vmatpush1.msra.mxu0 0.0
  %919 = vmatprep.subr.mxu0 0.0
  %920 = vmatpush1.msra.mxu0 0.0
  %921 = vmatprep.subr.mxu0 0.0
  %922 = vmatpush1.msra.mxu0 0.0
  %923 = vmatprep.mubr.f32.mxu0 0.0
  %924 = vmatmul.mubr.f32.gmra.mrb[0].mxu0 %v857
  %v925 = vpop.f32.mrb[0].mxu0
  %v926 = vadd.f32 0.0, %v925
  %v927 = vpop.f32.mrb[0].mxu0
  %v928 = vadd.f32 0.0, %v927
  %929 = vdwg.mxu0
  %930 = vmatprep.subr.mxu0 %v805
  %931 = vmatpush1.msra.mxu0 %v804
  %932 = vmatprep.subr.mxu0 %v811
  %933 = vmatpush1.msra.mxu0 %v810
  %934 = vmatprep.subr.mxu0 %v817
  %935 = vmatpush1.msra.mxu0 %v816
  %936 = vmatprep.subr.mxu0 %v823
  %937 = vmatpush1.msra.mxu0 %v822
  %938 = vmatprep.subr.mxu0 %v829
  %939 = vmatpush1.msra.mxu0 %v828
  %940 = vmatprep.subr.mxu0 %v835
  %941 = vmatpush1.msra.mxu0 %v834
  %942 = vmatprep.subr.mxu0 %v841
  %943 = vmatpush1.msra.mxu0 %v840
  %944 = vmatprep.subr.mxu0 %v847
  %945 = vmatpush1.msra.mxu0 %v846
  %946 = vmatprep.subr.mxu0 %v853
  %947 = vmatpush1.msra.mxu0 %v852
  %948 = vmatprep.subr.mxu0 0.0
  %949 = vmatpush1.msra.mxu0 0.0
  %950 = vmatprep.subr.mxu0 0.0
  %951 = vmatpush1.msra.mxu0 0.0
  %952 = vmatprep.subr.mxu0 0.0
  %953 = vmatpush1.msra.mxu0 0.0
  %954 = vmatprep.subr.mxu0 0.0
  %955 = vmatpush1.msra.mxu0 0.0
  %956 = vmatprep.subr.mxu0 0.0
  %957 = vmatpush1.msra.mxu0 0.0
  %958 = vmatprep.subr.mxu0 0.0
  %959 = vmatpush1.msra.mxu0 0.0
  %960 = vmatprep.subr.mxu0 0.0
  %961 = vmatpush1.msra.mxu0 0.0
  %962 = vmatprep.subr.mxu0 0.0
  %963 = vmatpush1.msra.mxu0 0.0
  %964 = vmatprep.subr.mxu0 0.0
  %965 = vmatpush1.msra.mxu0 0.0
  %966 = vmatprep.subr.mxu0 0.0
  %967 = vmatpush1.msra.mxu0 0.0
  %968 = vmatprep.subr.mxu0 0.0
  %969 = vmatpush1.msra.mxu0 0.0
  %970 = vmatprep.subr.mxu0 0.0
  %971 = vmatpush1.msra.mxu0 0.0
  %972 = vmatprep.subr.mxu0 0.0
  %973 = vmatpush1.msra.mxu0 0.0
  %974 = vmatprep.subr.mxu0 0.0
  %975 = vmatpush1.msra.mxu0 0.0
  %976 = vmatprep.subr.mxu0 0.0
  %977 = vmatpush1.msra.mxu0 0.0
  %978 = vmatprep.subr.mxu0 0.0
  %979 = vmatpush1.msra.mxu0 0.0
  %980 = vmatprep.subr.mxu0 0.0
  %981 = vmatpush1.msra.mxu0 0.0
  %982 = vmatprep.subr.mxu0 0.0
  %983 = vmatpush1.msra.mxu0 0.0
  %984 = vmatprep.subr.mxu0 0.0
  %985 = vmatpush1.msra.mxu0 0.0
  %986 = vmatprep.subr.mxu0 0.0
  %987 = vmatpush1.msra.mxu0 0.0
  %988 = vmatprep.subr.mxu0 0.0
  %989 = vmatpush1.msra.mxu0 0.0
  %990 = vmatprep.subr.mxu0 0.0
  %991 = vmatpush1.msra.mxu0 0.0
  %992 = vmatprep.subr.mxu0 0.0
  %993 = vmatpush1.msra.mxu0 0.0
  %994 = vmatprep.mubr.f32.mxu0 0.0
  %995 = vmatmul.mubr.f32.gmra.mrb[0].mxu0 %v857
  %v996 = vpop.f32.mrb[0].mxu0
  %v997 = vadd.f32 0.0, %v996
  %v998 = vpop.f32.mrb[0].mxu0
  %v999 = vadd.f32 0.0, %v998
  %1000 = vdwg.mxu0
  %1001 = vmatprep.subr.mxu0 %v807
  %1002 = vmatpush1.msra.mxu0 %v806
  %1003 = vmatprep.subr.mxu0 %v813
  %1004 = vmatpush1.msra.mxu0 %v812
  %1005 = vmatprep.subr.mxu0 %v819
  %1006 = vmatpush1.msra.mxu0 %v818
  %1007 = vmatprep.subr.mxu0 %v825
  %1008 = vmatpush1.msra.mxu0 %v824
  %1009 = vmatprep.subr.mxu0 %v831
  %1010 = vmatpush1.msra.mxu0 %v830
  %1011 = vmatprep.subr.mxu0 %v837
  %1012 = vmatpush1.msra.mxu0 %v836
  %1013 = vmatprep.subr.mxu0 %v843
  %1014 = vmatpush1.msra.mxu0 %v842
  %1015 = vmatprep.subr.mxu0 %v849
  %1016 = vmatpush1.msra.mxu0 %v848
  %1017 = vmatprep.subr.mxu0 %v855
  %1018 = vmatpush1.msra.mxu0 %v854
  %1019 = vmatprep.subr.mxu0 0.0
  %1020 = vmatpush1.msra.mxu0 0.0
  %1021 = vmatprep.subr.mxu0 0.0
  %1022 = vmatpush1.msra.mxu0 0.0
  %1023 = vmatprep.subr.mxu0 0.0
  %1024 = vmatpush1.msra.mxu0 0.0
  %1025 = vmatprep.subr.mxu0 0.0
  %1026 = vmatpush1.msra.mxu0 0.0
  %1027 = vmatprep.subr.mxu0 0.0
  %1028 = vmatpush1.msra.mxu0 0.0
  %1029 = vmatprep.subr.mxu0 0.0
  %1030 = vmatpush1.msra.mxu0 0.0
  %1031 = vmatprep.subr.mxu0 0.0
  %1032 = vmatpush1.msra.mxu0 0.0
  %1033 = vmatprep.subr.mxu0 0.0
  %1034 = vmatpush1.msra.mxu0 0.0
  %1035 = vmatprep.subr.mxu0 0.0
  %1036 = vmatpush1.msra.mxu0 0.0
  %1037 = vmatprep.subr.mxu0 0.0
  %1038 = vmatpush1.msra.mxu0 0.0
  %1039 = vmatprep.subr.mxu0 0.0
  %1040 = vmatpush1.msra.mxu0 0.0
  %1041 = vmatprep.subr.mxu0 0.0
  %1042 = vmatpush1.msra.mxu0 0.0
  %1043 = vmatprep.subr.mxu0 0.0
  %1044 = vmatpush1.msra.mxu0 0.0
  %1045 = vmatprep.subr.mxu0 0.0
  %1046 = vmatpush1.msra.mxu0 0.0
  %1047 = vmatprep.subr.mxu0 0.0
  %1048 = vmatpush1.msra.mxu0 0.0
  %1049 = vmatprep.subr.mxu0 0.0
  %1050 = vmatpush1.msra.mxu0 0.0
  %1051 = vmatprep.subr.mxu0 0.0
  %1052 = vmatpush1.msra.mxu0 0.0
  %1053 = vmatprep.subr.mxu0 0.0
  %1054 = vmatpush1.msra.mxu0 0.0
  %1055 = vmatprep.subr.mxu0 0.0
  %1056 = vmatpush1.msra.mxu0 0.0
  %1057 = vmatprep.subr.mxu0 0.0
  %1058 = vmatpush1.msra.mxu0 0.0
  %1059 = vmatprep.subr.mxu0 0.0
  %1060 = vmatpush1.msra.mxu0 0.0
  %1061 = vmatprep.subr.mxu0 0.0
  %1062 = vmatpush1.msra.mxu0 0.0
  %1063 = vmatprep.subr.mxu0 0.0
  %1064 = vmatpush1.msra.mxu0 0.0
  %1065 = vmatprep.mubr.f32.mxu0 0.0
  %1066 = vmatmul.mubr.f32.gmra.mrb[0].mxu0 %v857
  %v1067 = vpop.f32.mrb[0].mxu0
  %v1068 = vadd.f32 0.0, %v1067
  %v1069 = vpop.f32.mrb[0].mxu0
  %v1070 = vadd.f32 0.0, %v1069
  %1071 = vdwg.mxu0
  %v1072 = vmul.f32 %v926, %v32
  %v1073 = vmul.f32 %v928, %v33
  %v1074 = vmul.f32 %v997, %v34
  %v1075 = vmul.f32 %v999, %v35
  %v1076 = vmul.f32 %v1068, %v36
  %v1077 = vmul.f32 %v1070, %v37
  %v1078 = vmul.f32 %v1072, %v926
  %v1079 = vmul.f32 %v1073, %v928
  %v1080 = vmul.f32 %v1074, %v997
  %v1081 = vmul.f32 %v1075, %v999
  %v1082 = vmul.f32 %v1076, %v1068
  %v1083 = vmul.f32 %v1077, %v1070
  %v1084 = vadd.f32 %v1072, %v1073
  %v1085 = vadd.f32 %v1084, %v1074
  %v1086 = vadd.f32 %v1085, %v1075
  %v1087 = vadd.f32 %v1086, %v1076
  %v1088 = vadd.f32 %v1087, %v1077
  %1089 = vadd.xlane.f32.xlu0 %v1088
  %v1090 = vpop.xlane.xlu0 %1089
  %v1091 = vadd.f32 %v1078, %v1079
  %v1092 = vadd.f32 %v1091, %v1080
  %v1093 = vadd.f32 %v1092, %v1081
  %v1094 = vadd.f32 %v1093, %v1082
  %v1095 = vadd.f32 %v1094, %v1083
  %1096 = vadd.xlane.f32.xlu0 %v1095
  %v1097 = vpop.xlane.xlu0 %1096
  %v1098 = vmul.f32 %v1090, 0.001953125
  %v1099 = vmul.f32 %v1097, 0.001953125
  %v1100 = vmul.f32 %v1098, %v1098
  %v1101 = vsub.f32 %v1099, %v1100
  %v1102 = vmax.f32 %v1101, 0.0
  %v1103 = vsub.f32 %v926, %v1098
  %v1104 = vsub.f32 %v928, %v1098
  %v1105 = vsub.f32 %v997, %v1098
  %v1106 = vsub.f32 %v999, %v1098
  %v1107 = vsub.f32 %v1068, %v1098
  %v1108 = vsub.f32 %v1070, %v1098
  %v1109 = vadd.f32 %v1102, 1e-05
  %v1110 = vrsqrt.pop %v1109
  %v1111 = vmul.f32 %v1103, %v1110
  %v1112 = vmul.f32 %v1104, %v1110
  %v1113 = vmul.f32 %v1105, %v1110
  %v1114 = vmul.f32 %v1106, %v1110
  %v1115 = vmul.f32 %v1107, %v1110
  %v1116 = vmul.f32 %v1108, %v1110
  %1117 = vset.pattern.permute.xlu0 2
  %1118 = vperm.xlu0 %1117, %v38
  %v1119 = vpop.permute.xlu0 %1118
  %v1121 = vmul.f32 %v1111, %v1119
  %v1122 = vmul.f32 %v1112, %v1119
  %v1123 = vmul.f32 %v1113, %v1119
  %v1124 = vmul.f32 %v1114, %v1119
  %v1125 = vmul.f32 %v1115, %v1119
  %v1126 = vmul.f32 %v1116, %v1119
  %1127 = vset.pattern.permute.xlu0 3
  %1128 = vperm.xlu0 %1127, %v38
  %v1129 = vpop.permute.xlu0 %1128
  %v1131 = vadd.f32 %v1121, %v1129
  %v1132 = vadd.f32 %v1122, %v1129
  %v1133 = vadd.f32 %v1123, %v1129
  %v1134 = vadd.f32 %v1124, %v1129
  %v1135 = vadd.f32 %v1125, %v1129
  %v1136 = vadd.f32 %v1126, %v1129
  %v1137 = vmax.f32 %v1131, 0.0
  %v1138 = vmax.f32 %v1132, 0.0
  %v1139 = vmax.f32 %v1133, 0.0
  %v1140 = vmax.f32 %v1134, 0.0
  %v1141 = vmax.f32 %v1135, 0.0
  %v1142 = vmax.f32 %v1136, 0.0
  %v1143 = vadd.f32 %v20, %v1137
  %v1144 = vadd.f32 %v21, %v1138
  %v1145 = vadd.f32 %v22, %v1139
  %v1146 = vadd.f32 %v23, %v1140
  %v1147 = vadd.f32 %v24, %v1141
  %v1148 = vadd.f32 %v25, %v1142
  %1149 = vst [vmem:[%s5] sm:$0xff] %v1143
  %1150 = vst [vmem:[%s5 + $0x8] sm:$0xff] %v1144
  %1151 = vst [vmem:[%s5 + $0x10] sm:$0xff] %v1145
  %1152 = vst [vmem:[%s5 + $0x18] sm:$0xff] %v1146
  %1153 = vst [vmem:[%s5 + $0x20] sm:$0xff] %v1147
  %1154 = vst [vmem:[%s5 + $0x28] sm:$0xff] %v1148
  // Predicated region
  $region22: #{mgite_forward.1} parent=0 // pred_check
    _
  $region23: #{mgite_forward.1} parent=0 // pred_check_branch
    %1156 = sbr.rel (0) target = $region25
  $region24: #{mgite_forward.1} parent=0 // pred_region
    _
  $region25: #{mgite_forward.1} parent=0 // pred_fallthru
    _
  // Predicated region
  $region26: #{mgite_forward.1} parent=0 // pred_check
    _
  $region27: #{mgite_forward.1} parent=0 // pred_check_branch
    %1158 = sbr.rel (0) target = $region29
  $region28: #{mgite_forward.1} parent=0 // pred_region
    _
  $region29: #{mgite_forward.1} parent=0 // pred_fallthru
    _

</llo_original>
